<compile_context>
chip_gen: v7x
topology: tpu7x:2x2x1
jax: 0.10.0
libtpu: 0.0.40
codegen_flags: <defaults>
</compile_context>

<pallas_src>
import functools

import jax
import jax.numpy as jnp
from jax import lax
from jax.experimental import pallas as pl
from jax.experimental.pallas import tpu as pltpu


# --------------------------------- KV kernels ---------------------------------

def _kv_reduce_kernel(xp_ref, wred_ref, bred_ref, g_ref, beta_ref,
                      wk3t_ref, wv3_ref, k_ref, v_ref, *, num_heads, ln_eps):
    # Conv2d(kernel=stride=R) on this row-tile of patches: one matmul + bias.
    xp = xp_ref[0]                                                     # (TNr, Kf) bf16
    xr = jnp.dot(xp, wred_ref[...], preferred_element_type=jnp.float32)
    xr = xr + bred_ref[...]                                            # (TNr, C) f32

    # LayerNorm over channels (f32 statistics).
    mean = jnp.mean(xr, axis=-1, keepdims=True)
    var = jnp.mean(jnp.square(xr - mean), axis=-1, keepdims=True)
    xr = (xr - mean) * lax.rsqrt(var + ln_eps)
    xr = (xr * g_ref[...] + beta_ref[...]).astype(jnp.bfloat16)

    nr, c = xr.shape
    xr_b = jnp.broadcast_to(xr, (num_heads, nr, c))                    # heads as batch
    # K head-major with Nr as the minor (lane) dim -> canonical score matmul
    # downstream and no Dh-lane padding of the K block.
    k3 = lax.dot_general(wk3t_ref[...], xr_b, (((2,), (2,)), ((0,), (0,))),
                         preferred_element_type=jnp.float32)           # (H, Dh, TNr)
    v3 = lax.dot_general(xr_b, wv3_ref[...], (((2,), (1,)), ((0,), (0,))),
                         preferred_element_type=jnp.float32)           # (H, TNr, Dh)
    k_ref[0] = k3.astype(k_ref.dtype)
    v_ref[0] = v3.astype(v_ref.dtype)


def _kv_plain_kernel(x_ref, wk3t_ref, wv3_ref, k_ref, v_ref, *, num_heads):
    # reduction_ratio == 1: keys/values come straight from x (no conv / LN).
    x = x_ref[0]                                                       # (TNr, C) bf16
    n, c = x.shape
    x_b = jnp.broadcast_to(x, (num_heads, n, c))
    k3 = lax.dot_general(wk3t_ref[...], x_b, (((2,), (2,)), ((0,), (0,))),
                         preferred_element_type=jnp.float32)           # (H, Dh, TNr)
    v3 = lax.dot_general(x_b, wv3_ref[...], (((2,), (1,)), ((0,), (0,))),
                         preferred_element_type=jnp.float32)           # (H, TNr, Dh)
    k_ref[0] = k3.astype(k_ref.dtype)
    v_ref[0] = v3.astype(v_ref.dtype)


# ------------------------------ Attention kernel -------------------------------

def _attn_kernel(x_ref, k_ref, v_ref, wq3_ref, wp3_ref, bp_ref, o_ref, *, num_heads):
    xq = x_ref[0]                                                      # (TQ, C) bf16
    k3 = k_ref[0]                                                      # (H, Dh, Nr) bf16
    v3 = v_ref[0]                                                      # (H, Nr, Dh) bf16
    tq, c = xq.shape

    # Head-batched Q projection; attention scale already folded into Wq (host side).
    xq_b = jnp.broadcast_to(xq, (num_heads, tq, c))
    q3 = lax.dot_general(xq_b, wq3_ref[...], (((2,), (1,)), ((0,), (0,))),
                         preferred_element_type=jnp.float32)
    q3 = q3.astype(jnp.bfloat16)                                       # (H, TQ, Dh)

    # Scores: canonical batched matmul against Nr-minor K (no transposed RHS), f32 acc.
    s = lax.dot_general(q3, k3, (((2,), (1,)), ((0,), (0,))),
                        preferred_element_type=jnp.float32)            # (H, TQ, Nr)

    # Numerically-stable softmax statistics in f32; normalization deferred until
    # after the PV matmul (rescale (H,TQ,Dh) instead of (H,TQ,Nr)).
    s = s - jnp.max(s, axis=-1, keepdims=True)
    p = jnp.exp(s)
    denom = jnp.sum(p, axis=-1, keepdims=True)                         # (H, TQ, 1)

    # Per-head context with un-normalized probabilities (contraction over Nr).
    oh = lax.dot_general(p.astype(jnp.bfloat16), v3, (((2,), (1,)), ((0,), (0,))),
                         preferred_element_type=jnp.float32)           # (H, TQ, Dh)
    oh = (oh * pl.reciprocal(denom, approx=True)).astype(jnp.bfloat16)

    # Output projection: ONE batched matmul over heads + head-sum (no serialized
    # per-head accumulator chain / Python loop).
    ctx = lax.dot_general(oh, wp3_ref[...], (((2,), (1,)), ((0,), (0,))),
                          preferred_element_type=jnp.float32)          # (H, TQ, C)
    out = jnp.sum(ctx, axis=0) + bp_ref[...]                           # (TQ, C) f32
    o_ref[0] = out.astype(o_ref.dtype)


# ---------------------------------- Wrapper ------------------------------------

def _vmem_limit_bytes():
    """Per-generation scoped-VMEM budget (v5e/v6e: 128 MiB, v7x: 64 MiB/TC)."""
    cap = 64 * 1024 * 1024                          # conservative default (v7x per-TC)
    try:
        cap = int(pltpu.get_tpu_info().vmem_capacity_bytes)
    except Exception:
        pass
    return max(32 * 1024 * 1024, min(cap * 3 // 4, 100 * 1024 * 1024))


def _pick_query_tile(n, nr, c, h, out_itemsize, budget):
    """Largest query tile whose stage-2 working set fits the VMEM budget."""
    dh = c // h

    def working_set(tq):
        w = 2 * tq * c * 2                 # x tile (bf16, double-buffered)
        w += 2 * tq * c * out_itemsize     # out tile (double-buffered)
        w += 2 * 2 * c * nr * 2            # K + V blocks (bf16, 2 buffers each)
        w += 2 * 2 * c * c * 2             # Wq + Wp (bf16, 2 buffers each)
        w += h * tq * c * 2                # broadcast xq
        w += h * tq * dh * 6               # q3 (f32 + bf16)
        w += h * tq * nr * 10              # scores f32 + exp f32 + p bf16
        w += h * tq * dh * 6               # oh (f32 + bf16)
        w += h * tq * c * 4                # per-head projected context (f32)
        w += tq * c * 4                    # summed output (f32)
        return w

    for tq in (2048, 1024, 512, 256, 128, 64, 32, 16, 8):
        if tq <= n and n % tq == 0 and working_set(tq) <= budget:
            return tq
    for tq in (8, 16, 32, 64, 128, 256, 512):
        if tq <= n and n % tq == 0:
            return tq
    return n


def _pick_kv_tile(nr):
    # Tile the reduced-token axis so the KV stage has >=2 grid steps (pipelining,
    # and both TensorCores on v7x even at B=1).  Tiles smaller than Nr must be
    # multiples of 128 because Nr is the lane (minor) dim of the K output.
    for t in (512, 256, 128):
        if t < nr and nr % t == 0:
            return t
    return nr


def efficient_self_attention(x, params, H, W, *, num_heads, reduction_ratio,
                             out_dtype=None):
    """x: (B, N, C) with N = H*W. Returns (B, N, C)."""
    B, N, C = x.shape
    R = reduction_ratio
    Dh = C // num_heads
    scale = Dh ** -0.5
    out_dtype = x.dtype if out_dtype is None else out_dtype
    vmem_limit = _vmem_limit_bytes()

    # bf16 operands for all MXU matmuls (accumulation is f32 inside the kernels).
    x_bf = x.astype(jnp.bfloat16)
    # Attention scale folded into Wq (free at weight-prep time).
    wq3 = (params["wq"] * scale).reshape(C, num_heads, Dh).transpose(1, 0, 2).astype(jnp.bfloat16)
    # Wk transposed per head -> K is produced directly in (H, Dh, Nr) layout.
    wk3t = params["wk"].reshape(C, num_heads, Dh).transpose(1, 2, 0).astype(jnp.bfloat16)
    wv3 = params["wv"].reshape(C, num_heads, Dh).transpose(1, 0, 2).astype(jnp.bfloat16)
    wp3 = params["wp"].reshape(num_heads, Dh, C).astype(jnp.bfloat16)
    bp = params["bp"].astype(jnp.float32)

    # ---------------- Stage 1: K / V (reduced when R > 1), head-major ----------------
    if R > 1:
        Hr, Wr = H // R, W // R
        Nr = Hr * Wr
        Kf = C * R * R
        # TODO(synk): extract the RxR patches inside the kernel (strided loads on a
        # resident x tile) to avoid this HBM-side relayout of x (matters most on v5e).
        patches = x_bf.reshape(B, Hr, R, Wr, R, C).transpose(0, 1, 3, 5, 2, 4)
        patches = patches.reshape(B, Nr, Kf)
        w_red = params["w_red"].astype(jnp.bfloat16)
        TNr = _pick_kv_tile(Nr)

        kv_kernel = functools.partial(_kv_reduce_kernel, num_heads=num_heads, ln_eps=1e-5)
        kv_inputs = (patches, w_red, params["b_red"], params["ln_g"], params["ln_b"],
                     wk3t, wv3)
        kv_in_specs = [
            pl.BlockSpec((1, TNr, Kf), lambda b, j: (b, j, 0)),          # patches tile
            pl.BlockSpec((Kf, C), lambda b, j: (0, 0)),                  # W_red
            pl.BlockSpec((1, C), lambda b, j: (0, 0)),                   # b_red
            pl.BlockSpec((1, C), lambda b, j: (0, 0)),                   # ln gamma
            pl.BlockSpec((1, C), lambda b, j: (0, 0)),                   # ln beta
            pl.BlockSpec((num_heads, Dh, C), lambda b, j: (0, 0, 0)),    # Wk^T (head-major)
            pl.BlockSpec((num_heads, C, Dh), lambda b, j: (0, 0, 0)),    # Wv   (head-major)
        ]
    else:
        Nr = N
        TNr = _pick_kv_tile(Nr)
        kv_kernel = functools.partial(_kv_plain_kernel, num_heads=num_heads)
        kv_inputs = (x_bf, wk3t, wv3)                                    # x passed only once
        kv_in_specs = [
            pl.BlockSpec((1, TNr, C), lambda b, j: (b, j, 0)),
            pl.BlockSpec((num_heads, Dh, C), lambda b, j: (0, 0, 0)),
            pl.BlockSpec((num_heads, C, Dh), lambda b, j: (0, 0, 0)),
        ]

    k_shape = jax.ShapeDtypeStruct((B, num_heads, Dh, Nr), jnp.bfloat16)  # Nr-minor
    v_shape = jax.ShapeDtypeStruct((B, num_heads, Nr, Dh), jnp.bfloat16)
    k_spec = pl.BlockSpec((1, num_heads, Dh, TNr), lambda b, j: (b, 0, 0, j))
    v_spec = pl.BlockSpec((1, num_heads, TNr, Dh), lambda b, j: (b, 0, j, 0))
    k3, v3 = pl.pallas_call(
        kv_kernel,
        out_shape=(k_shape, v_shape),
        grid_spec=pltpu.PrefetchScalarGridSpec(
            num_scalar_prefetch=0,
            grid=(B, Nr // TNr),
            in_specs=kv_in_specs,
            out_specs=(k_spec, v_spec),
        ),
        compiler_params=pltpu.CompilerParams(
            dimension_semantics=("parallel", "parallel"),
            vmem_limit_bytes=vmem_limit),
    )(*kv_inputs)

    # ---------------- Stage 2: attention, tiled over the query/token axis ----------------
    TQ = _pick_query_tile(N, Nr, C, num_heads, jnp.dtype(out_dtype).itemsize,
                          int(vmem_limit * 0.7))
    attn_kernel = functools.partial(_attn_kernel, num_heads=num_heads)

    out = pl.pallas_call(
        attn_kernel,
        out_shape=jax.ShapeDtypeStruct((B, N, C), out_dtype),
        grid_spec=pltpu.PrefetchScalarGridSpec(
            num_scalar_prefetch=0,
            grid=(B, N // TQ),
            in_specs=[
                pl.BlockSpec((1, TQ, C), lambda b, qi: (b, qi, 0)),                 # x tile
                pl.BlockSpec((1, num_heads, Dh, Nr), lambda b, qi: (b, 0, 0, 0)),    # K
                pl.BlockSpec((1, num_heads, Nr, Dh), lambda b, qi: (b, 0, 0, 0)),    # V
                pl.BlockSpec((num_heads, C, Dh), lambda b, qi: (0, 0, 0)),          # Wq (scaled)
                pl.BlockSpec((num_heads, Dh, C), lambda b, qi: (0, 0, 0)),          # Wp
                pl.BlockSpec((1, C), lambda b, qi: (0, 0)),                         # bp
            ],
            out_specs=pl.BlockSpec((1, TQ, C), lambda b, qi: (b, qi, 0)),
        ),
        compiler_params=pltpu.CompilerParams(
            dimension_semantics=("parallel", "parallel"),   # v7x: both TCs even at B=1
            vmem_limit_bytes=vmem_limit),
    )(x_bf, k3, v3, wq3, wp3, bp)
    return out


# ------------------------------ Reference & test --------------------------------

def reference(x, params, H, W, *, num_heads, reduction_ratio):
    """Pure-JAX f32 replica of the PyTorch forward (real conv for the reduction)."""
    B, N, C = x.shape
    R = reduction_ratio
    Dh = C // num_heads
    scale = Dh ** -0.5
    hp = lax.Precision.HIGHEST

    q = jnp.matmul(x, params["wq"], precision=hp)
    q = q.reshape(B, N, num_heads, Dh).transpose(0, 2, 1, 3)

    if R > 1:
        x_img = x.transpose(0, 2, 1).reshape(B, C, H, W)              # NCHW
        xr = lax.conv_general_dilated(
            x_img, params["conv_w"], window_strides=(R, R), padding="VALID",
            dimension_numbers=("NCHW", "OIHW", "NCHW"), precision=hp)
        xr = xr + params["b_red"].reshape(1, C, 1, 1)
        Nr = (H // R) * (W // R)
        xr = xr.reshape(B, C, Nr).transpose(0, 2, 1)                  # (B, Nr, C)
        mean = xr.mean(-1, keepdims=True)
        var = ((xr - mean) ** 2).mean(-1, keepdims=True)
        xr = (xr - mean) / jnp.sqrt(var + 1e-5)
        xr = xr * params["ln_g"].reshape(1, 1, C) + params["ln_b"].reshape(1, 1, C)
    else:
        xr = x
        Nr = N

    k = jnp.matmul(xr, params["wk"], precision=hp).reshape(B, Nr, num_heads, Dh).transpose(0, 2, 1, 3)
    v = jnp.matmul(xr, params["wv"], precision=hp).reshape(B, Nr, num_heads, Dh).transpose(0, 2, 1, 3)

    attn = jnp.einsum("bhnd,bhmd->bhnm", q, k, precision=hp) * scale
    attn = jax.nn.softmax(attn, axis=-1)
    out = jnp.einsum("bhnm,bhmd->bhnd", attn, v, precision=hp)
    out = out.transpose(0, 2, 1, 3).reshape(B, N, C)
    out = jnp.matmul(out, params["wp"], precision=hp) + params["bp"].reshape(1, 1, C)
    return out


def make_params(key, d_model, reduction_ratio):
    C, R = d_model, reduction_ratio
    ks = jax.random.split(key, 8)
    conv_w = jax.random.normal(ks[0], (C, C, R, R), jnp.float32) * 0.1   # (out, in, kh, kw)
    params = dict(
        conv_w=conv_w,
        # matmul form of the conv: feature order (c_in, ki, kj) -> columns = c_out
        w_red=conv_w.reshape(C, C * R * R).T,
        b_red=(jax.random.normal(ks[1], (1, C), jnp.float32) * 0.1),
        ln_g=1.0 + jax.random.normal(ks[2], (1, C), jnp.float32) * 0.05,
        ln_b=jax.random.normal(ks[3], (1, C), jnp.float32) * 0.05,
        # Linear weights stored as (in, out)  (== torch weight.T)
        wq=jax.random.normal(ks[4], (C, C), jnp.float32) * 0.1,
        wk=jax.random.normal(ks[5], (C, C), jnp.float32) * 0.1,
        wv=jax.random.normal(ks[6], (C, C), jnp.float32) * 0.1,
        wp=jax.random.normal(ks[7], (C, C), jnp.float32) * 0.1,
        bp=jnp.zeros((1, C), jnp.float32) + 0.01,
    )
    return params


if __name__ == "__main__":
    B, H, W = 2, 16, 16
    d_model, num_heads, reduction_ratio = 32, 4, 2
    N = H * W

    key = jax.random.PRNGKey(0)
    k_x, k_p = jax.random.split(key)
    x = jax.random.normal(k_x, (B, N, d_model), jnp.float32)
    params = make_params(k_p, d_model, reduction_ratio)

    out = efficient_self_attention(
        x, params, H, W, num_heads=num_heads, reduction_ratio=reduction_ratio)
    out = jax.block_until_ready(out)

    ref = jax.block_until_ready(
        reference(x, params, H, W, num_heads=num_heads, reduction_ratio=reduction_ratio))

    assert out.shape == (B, N, d_model)
    assert jnp.all(jnp.isfinite(out))
    # bf16 MXU operands (f32 accumulation) vs f32 HIGHEST-precision reference.
    assert jnp.allclose(out, ref, atol=1e-2, rtol=1e-2), (
        f"max abs diff {jnp.max(jnp.abs(out - ref))}")

    print("KERNEL_OK")
</pallas_src>

<mosaic_0001>
module attributes {stable_mosaic.version = 11 : i64} {
  func.func @_kv_reduce_kernel(%arg0: i32, %arg1: i32, %arg2: memref<1x64x128xbf16, #tpu.memory_space<vmem>>, %arg3: memref<128x32xbf16, #tpu.memory_space<vmem>>, %arg4: memref<1x32xf32, #tpu.memory_space<vmem>>, %arg5: memref<1x32xf32, #tpu.memory_space<vmem>>, %arg6: memref<1x32xf32, #tpu.memory_space<vmem>>, %arg7: memref<4x8x32xbf16, #tpu.memory_space<vmem>>, %arg8: memref<4x32x8xbf16, #tpu.memory_space<vmem>>, %arg9: memref<1x4x8x64xbf16, #tpu.memory_space<vmem>>, %arg10: memref<1x4x64x8xbf16, #tpu.memory_space<vmem>>) attributes {dimension_semantics = [#tpu.dimension_semantics<parallel>, #tpu.dimension_semantics<parallel>], iteration_bounds = array<i64: 2, 1>, scalar_prefetch = 0 : i64, scratch_operands = 0 : i64, tpu.core_type = #tpu.core_type<tc>, window_params = [{transform_indices = @transform_0, window_bounds = array<i64: 1, 64, 128>}, {pipeline_mode = #tpu.pipeline_mode<synchronous>, transform_indices = @transform_1, window_bounds = array<i64: 128, 32>}, {pipeline_mode = #tpu.pipeline_mode<synchronous>, transform_indices = @transform_2, window_bounds = array<i64: 1, 32>}, {pipeline_mode = #tpu.pipeline_mode<synchronous>, transform_indices = @transform_3, window_bounds = array<i64: 1, 32>}, {pipeline_mode = #tpu.pipeline_mode<synchronous>, transform_indices = @transform_4, window_bounds = array<i64: 1, 32>}, {pipeline_mode = #tpu.pipeline_mode<synchronous>, transform_indices = @transform_5, window_bounds = array<i64: 4, 8, 32>}, {pipeline_mode = #tpu.pipeline_mode<synchronous>, transform_indices = @transform_6, window_bounds = array<i64: 4, 32, 8>}, {transform_indices = @transform_7, window_bounds = array<i64: 1, 4, 8, 64>}, {transform_indices = @transform_8, window_bounds = array<i64: 1, 4, 64, 8>}]} {
    %c0 = arith.constant 0 : index
    %c0_0 = arith.constant 0 : index
    %c0_1 = arith.constant 0 : index
    %0 = vector.load %arg2[%c0, %c0_0, %c0_1] : memref<1x64x128xbf16, #tpu.memory_space<vmem>>, vector<1x64x128xbf16>
    %1 = vector.shape_cast %0 : vector<1x64x128xbf16> to vector<64x128xbf16>
    %c0_2 = arith.constant 0 : index
    %c0_3 = arith.constant 0 : index
    %2 = vector.load %arg3[%c0_2, %c0_3] : memref<128x32xbf16, #tpu.memory_space<vmem>>, vector<128x32xbf16>
    %cst = arith.constant dense<0.000000e+00> : vector<64x32xf32>
    %3 = tpu.matmul %1, %2, %cst {dimension_numbers = #tpu.dot_dimension_numbers<[1], [0], [0], [1], [0, 0, 1, 1], [], []>} : vector<64x128xbf16>, vector<128x32xbf16>, vector<64x32xf32> -> vector<64x32xf32>
    %c0_4 = arith.constant 0 : index
    %c0_5 = arith.constant 0 : index
    %4 = vector.load %arg4[%c0_4, %c0_5] : memref<1x32xf32, #tpu.memory_space<vmem>>, vector<1x32xf32>
    %5 = vector.broadcast %4 : vector<1x32xf32> to vector<64x32xf32>
    %6 = arith.addf %3, %5 : vector<64x32xf32>
    %cst_6 = arith.constant dense<0.000000e+00> : vector<64xf32>
    %7 = vector.multi_reduction <add>, %6, %cst_6 [1] : vector<64x32xf32> to vector<64xf32>
    %8 = vector.shape_cast %7 : vector<64xf32> to vector<64x1xf32>
    %cst_7 = arith.constant 3.200000e+01 : f32
    %9 = vector.broadcast %cst_7 : f32 to vector<64x1xf32>
    %10 = arith.divf %8, %9 : vector<64x1xf32>
    %11 = vector.broadcast %10 : vector<64x1xf32> to vector<64x32xf32>
    %12 = arith.subf %6, %11 : vector<64x32xf32>
    %13 = arith.mulf %12, %12 : vector<64x32xf32>
    %cst_8 = arith.constant dense<0.000000e+00> : vector<64xf32>
    %14 = vector.multi_reduction <add>, %13, %cst_8 [1] : vector<64x32xf32> to vector<64xf32>
    %15 = vector.shape_cast %14 : vector<64xf32> to vector<64x1xf32>
    %cst_9 = arith.constant 3.200000e+01 : f32
    %16 = vector.broadcast %cst_9 : f32 to vector<64x1xf32>
    %17 = arith.divf %15, %16 : vector<64x1xf32>
    %18 = vector.broadcast %10 : vector<64x1xf32> to vector<64x32xf32>
    %19 = arith.subf %6, %18 : vector<64x32xf32>
    %cst_10 = arith.constant 9.99999974E-6 : f32
    %20 = vector.broadcast %cst_10 : f32 to vector<64x1xf32>
    %21 = arith.addf %17, %20 : vector<64x1xf32>
    %22 = math.rsqrt %21 : vector<64x1xf32>
    %23 = vector.broadcast %22 : vector<64x1xf32> to vector<64x32xf32>
    %24 = arith.mulf %19, %23 : vector<64x32xf32>
    %c0_11 = arith.constant 0 : index
    %c0_12 = arith.constant 0 : index
    %25 = vector.load %arg5[%c0_11, %c0_12] : memref<1x32xf32, #tpu.memory_space<vmem>>, vector<1x32xf32>
    %26 = vector.broadcast %25 : vector<1x32xf32> to vector<64x32xf32>
    %27 = arith.mulf %24, %26 : vector<64x32xf32>
    %c0_13 = arith.constant 0 : index
    %c0_14 = arith.constant 0 : index
    %28 = vector.load %arg6[%c0_13, %c0_14] : memref<1x32xf32, #tpu.memory_space<vmem>>, vector<1x32xf32>
    %29 = vector.broadcast %28 : vector<1x32xf32> to vector<64x32xf32>
    %30 = arith.addf %27, %29 : vector<64x32xf32>
    %31 = arith.truncf %30 : vector<64x32xf32> to vector<64x32xbf16>
    %32 = vector.shape_cast %31 : vector<64x32xbf16> to vector<1x64x32xbf16>
    %33 = vector.broadcast %32 : vector<1x64x32xbf16> to vector<4x64x32xbf16>
    %c0_15 = arith.constant 0 : index
    %c0_16 = arith.constant 0 : index
    %c0_17 = arith.constant 0 : index
    %34 = vector.load %arg7[%c0_15, %c0_16, %c0_17] : memref<4x8x32xbf16, #tpu.memory_space<vmem>>, vector<4x8x32xbf16>
    %cst_18 = arith.constant dense<0.000000e+00> : vector<4x8x64xf32>
    %35 = tpu.matmul %34, %33, %cst_18 {dimension_numbers = #tpu.dot_dimension_numbers<[2], [2], [1], [1], [0, 0, 0, 1, 1, 1], [0], [0]>} : vector<4x8x32xbf16>, vector<4x64x32xbf16>, vector<4x8x64xf32> -> vector<4x8x64xf32>
    %c0_19 = arith.constant 0 : index
    %c0_20 = arith.constant 0 : index
    %c0_21 = arith.constant 0 : index
    %36 = vector.load %arg8[%c0_19, %c0_20, %c0_21] : memref<4x32x8xbf16, #tpu.memory_space<vmem>>, vector<4x32x8xbf16>
    %cst_22 = arith.constant dense<0.000000e+00> : vector<4x64x8xf32>
    %37 = tpu.matmul %33, %36, %cst_22 {dimension_numbers = #tpu.dot_dimension_numbers<[2], [1], [1], [2], [0, 0, 0, 1, 1, 2], [0], [0]>} : vector<4x64x32xbf16>, vector<4x32x8xbf16>, vector<4x64x8xf32> -> vector<4x64x8xf32>
    %38 = arith.truncf %35 : vector<4x8x64xf32> to vector<4x8x64xbf16>
    %c0_23 = arith.constant 0 : index
    %c0_24 = arith.constant 0 : index
    %c0_25 = arith.constant 0 : index
    %c0_26 = arith.constant 0 : index
    %39 = vector.load %arg9[%c0_23, %c0_24, %c0_25, %c0_26] : memref<1x4x8x64xbf16, #tpu.memory_space<vmem>>, vector<1x4x8x64xbf16>
    %40 = vector.shape_cast %39 : vector<1x4x8x64xbf16> to vector<4x8x64xbf16>
    %41 = vector.shape_cast %38 : vector<4x8x64xbf16> to vector<1x4x8x64xbf16>
    tpu.vector_store %arg9[%c0_23, %c0_24, %c0_25, %c0_26], %41 {strides = array<i32>} : memref<1x4x8x64xbf16, #tpu.memory_space<vmem>>, vector<1x4x8x64xbf16>,
    %42 = arith.truncf %37 : vector<4x64x8xf32> to vector<4x64x8xbf16>
    %c0_27 = arith.constant 0 : index
    %c0_28 = arith.constant 0 : index
    %c0_29 = arith.constant 0 : index
    %c0_30 = arith.constant 0 : index
    %43 = vector.load %arg10[%c0_27, %c0_28, %c0_29, %c0_30] : memref<1x4x64x8xbf16, #tpu.memory_space<vmem>>, vector<1x4x64x8xbf16>
    %44 = vector.shape_cast %43 : vector<1x4x64x8xbf16> to vector<4x64x8xbf16>
    %45 = vector.shape_cast %42 : vector<4x64x8xbf16> to vector<1x4x64x8xbf16>
    tpu.vector_store %arg10[%c0_27, %c0_28, %c0_29, %c0_30], %45 {strides = array<i32>} : memref<1x4x64x8xbf16, #tpu.memory_space<vmem>>, vector<1x4x64x8xbf16>,
    return
  }
  func.func @transform_0(%arg0: i32, %arg1: i32) -> (i32, i32, i32) {
    %c0_i32 = arith.constant 0 : i32
    %c0_i32_0 = arith.constant 0 : i32
    return %arg0, %arg1, %c0_i32 : i32, i32, i32
  }
  func.func @transform_1(%arg0: i32, %arg1: i32) -> (i32, i32) {
    %c0_i32 = arith.constant 0 : i32
    %c0_i32_0 = arith.constant 0 : i32
    %c0_i32_1 = arith.constant 0 : i32
    return %c0_i32, %c0_i32_0 : i32, i32
  }
  func.func @transform_2(%arg0: i32, %arg1: i32) -> (i32, i32) {
    %c0_i32 = arith.constant 0 : i32
    %c0_i32_0 = arith.constant 0 : i32
    %c0_i32_1 = arith.constant 0 : i32
    return %c0_i32, %c0_i32_0 : i32, i32
  }
  func.func @transform_3(%arg0: i32, %arg1: i32) -> (i32, i32) {
    %c0_i32 = arith.constant 0 : i32
    %c0_i32_0 = arith.constant 0 : i32
    %c0_i32_1 = arith.constant 0 : i32
    return %c0_i32, %c0_i32_0 : i32, i32
  }
  func.func @transform_4(%arg0: i32, %arg1: i32) -> (i32, i32) {
    %c0_i32 = arith.constant 0 : i32
    %c0_i32_0 = arith.constant 0 : i32
    %c0_i32_1 = arith.constant 0 : i32
    return %c0_i32, %c0_i32_0 : i32, i32
  }
  func.func @transform_5(%arg0: i32, %arg1: i32) -> (i32, i32, i32) {
    %c0_i32 = arith.constant 0 : i32
    %c0_i32_0 = arith.constant 0 : i32
    %c0_i32_1 = arith.constant 0 : i32
    %c0_i32_2 = arith.constant 0 : i32
    return %c0_i32, %c0_i32_0, %c0_i32_1 : i32, i32, i32
  }
  func.func @transform_6(%arg0: i32, %arg1: i32) -> (i32, i32, i32) {
    %c0_i32 = arith.constant 0 : i32
    %c0_i32_0 = arith.constant 0 : i32
    %c0_i32_1 = arith.constant 0 : i32
    %c0_i32_2 = arith.constant 0 : i32
    return %c0_i32, %c0_i32_0, %c0_i32_1 : i32, i32, i32
  }
  func.func @transform_7(%arg0: i32, %arg1: i32) -> (i32, i32, i32, i32) {
    %c0_i32 = arith.constant 0 : i32
    %c0_i32_0 = arith.constant 0 : i32
    %c0_i32_1 = arith.constant 0 : i32
    return %arg0, %c0_i32, %c0_i32_0, %arg1 : i32, i32, i32, i32
  }
  func.func @transform_8(%arg0: i32, %arg1: i32) -> (i32, i32, i32, i32) {
    %c0_i32 = arith.constant 0 : i32
    %c0_i32_0 = arith.constant 0 : i32
    %c0_i32_1 = arith.constant 0 : i32
    return %arg0, %c0_i32, %arg1, %c0_i32_0 : i32, i32, i32, i32
  }
}

</mosaic_0001>

<llo_original>
// kernel: tpu_custom_call.1
$region0: #{tpu_custom_call.1}
  #allocation0 [shape = 'u32[]', space=smem, size = 0x4, offset = 0x4, fixed_abs, tag = 'smem constant byte address 0x4 - core index']
  #allocation1 [shape = 'u32[144,128]{1,0:T(1,128)}', space=vmem, size = 0x12000, scoped, tag = 'internal scratch']
  %s0 = inlined_call_operand.vmem [shape: bf16[2,64,128], index: 0, kind: input, shape index: {}]
  %s1 = inlined_call_operand.vmem [shape: bf16[128,32], index: 1, kind: input, shape index: {}]
  %s2 = inlined_call_operand.vmem [shape: f32[1,32], index: 2, kind: input, shape index: {}]
  %s3 = inlined_call_operand.vmem [shape: f32[1,32], index: 3, kind: input, shape index: {}]
  %s4 = inlined_call_operand.vmem [shape: f32[1,32], index: 4, kind: input, shape index: {}]
  %s5 = inlined_call_operand.vmem [shape: bf16[4,8,32], index: 5, kind: input, shape index: {}]
  %s6 = inlined_call_operand.vmem [shape: bf16[4,32,8], index: 6, kind: input, shape index: {}]
  %s7 = inlined_call_operand.hbm [shape: bf16[2,4,8,64], index: 7, kind: output, shape index: {0}]
  %s8 = inlined_call_operand.vmem [shape: bf16[2,4,64,8], index: 8, kind: output, shape index: {1}]
  %9 = xla_tuple %s7, %s8
  %s10 = sld [smem:[#allocation0]]
  $region69: #{tpu_custom_call.1} parent=0
    _
  %s12 = ssub.s32 1, %s10
  %s13 = scalar_select 0, %s12, %s10
  $region1: #{tpu_custom_call.1} parent=0
    #allocation2 [shape = 'u8[16384]{0}', space=vmem, size = 0x4000, scoped, tag = 'output window, operand 0']
    #allocation3 [shape = 's32[2]{0}', space=sflag, size = 0x8, scoped, tag = 'scoped memory for tpu_custom_call.1']
    %14 = vsyncpa [#allocation3], 0
    %s15 = scalar_lea.sflag [#allocation3], 1
    %16 = vsyncpa %s15, 0
    loop: start=0, step=1, limit=4
    $region2: #{tpu_custom_call.1} parent=1 // loop_pre_header
      _
    $region3: #{tpu_custom_call.1} parent=1 // loop_header
      %s18 = sphi 0, %s22
      %p19 = scmp.ge.s32.totalorder %s18, 4
      %s25 = sphi 0, %s37
      %s26 = sphi 0, %s33
      %s27 = sphi 0, %s25
      %s28 = sphi 0, %s26
      %s29 = sphi 0, %s27
      %s30 = sphi 0, %s28
      %s42 = sphi 0, %s44
      %s45 = sphi 0, %s42
      %s46 = sphi 0, %s45
      %s62 = sphi 0, %s46
      %s66 = sphi 0, %s66
      %s68 = sphi 0, %s66
      %s69 = sphi 0, %s68
      %s83 = sphi 0, %s69
      %s87 = sphi 0, %s87
      %s89 = sphi 0, %s87
      %s90 = sphi 0, %s89
      %s104 = sphi 0, %s90
      %s108 = sphi 0, %s108
      %s110 = sphi 0, %s108
      %s111 = sphi 0, %s110
      %s125 = sphi 0, %s111
      %s129 = sphi 0, %s129
      %s131 = sphi 0, %s129
      %s132 = sphi 0, %s131
      %s146 = sphi 0, %s132
      %s150 = sphi 0, %s150
      %s152 = sphi 0, %s150
      %s153 = sphi 0, %s152
      %s167 = sphi 0, %s153
      %s171 = sphi 0, %s171
      %s173 = sphi 0, %s171
      %s174 = sphi 0, %s173
      %s188 = sphi 0, %s174
      %s196 = sphi 0, %s198
      %s199 = sphi 0, %s196
      %s200 = sphi 0, %s199
      %s216 = sphi 0, %s200
      %s224 = sphi 0, %s226
      %s227 = sphi 0, %s224
      %s228 = sphi 0, %s227
      %s244 = sphi 0, %s228
    $region4: #{tpu_custom_call.1} parent=1 // loop_header_branch
      %21 = sbr.rel (%p19) target = $region8
    $region5: #{tpu_custom_call.1} parent=1 // loop_body
      %s23 = ssub.s32 %s18, 1
      %s24 = ssub.s32 %s18, 2
      %s31 = sadd.s32 1, %s26
      %p32 = scmp.ge.s32.totalorder %s31, 1
      %s33 = scalar_select %p32, 0, %s31
      %s34 = sadd.s32 1, %s25
      %s35 = scalar_select %p32, %s34, %s25
      %p36 = scmp.ge.s32.totalorder %s35, 2
      %s37 = scalar_select %p36, 0, %s35
      %s38 = ssub.s32 %s25, %s37
      %s39 = ssub.s32 %s26, %s33
      %s40 = sor.u32 %s38, %s39
      %p41 = scmp.eq.s32.totalorder %s40, 0
      %s43 = sadd.s32 %s42, 1
      %s44 = scalar_select %p41, %s42, %s43
      %p47 = pneg %p41
      %p48 = scmp.eq.s32.totalorder %s18, 1
      %p49 = por %p47, %p48
      %p50 = scmp.ne.s32.totalorder %s42, %s45
      %p51 = scmp.eq.s32.totalorder %s18, 0
      %p52 = por %p50, %p51
      %p53 = scmp.ne.s32.totalorder %s42, %s45
      %p54 = scmp.eq.s32.totalorder %s23, 1
      %p55 = por %p53, %p54
      %p56 = scmp.ne.s32.totalorder %s45, %s46
      %p57 = scmp.eq.s32.totalorder %s23, 0
      %p58 = por %p56, %p57
      %p59 = scmp.ne.s32.totalorder %s45, %s46
      %p60 = scmp.eq.s32.totalorder %s24, 1
      %p61 = por %p59, %p60
      %p63 = scmp.ne.s32.totalorder %s46, %s62
      %p64 = scmp.eq.s32.totalorder %s24, 0
      %p65 = por %p63, %p64
      %s67 = sadd.s32 %s66, 1
      %p70 = scmp.eq.s32.totalorder %s18, 1
      %p71 = scmp.ne.s32.totalorder %s66, %s68
      %p72 = scmp.eq.s32.totalorder %s18, 0
      %p73 = por %p71, %p72
      %p74 = scmp.ne.s32.totalorder %s66, %s68
      %p75 = scmp.eq.s32.totalorder %s23, 1
      %p76 = por %p74, %p75
      %p77 = scmp.ne.s32.totalorder %s68, %s69
      %p78 = scmp.eq.s32.totalorder %s23, 0
      %p79 = por %p77, %p78
      %p80 = scmp.ne.s32.totalorder %s68, %s69
      %p81 = scmp.eq.s32.totalorder %s24, 1
      %p82 = por %p80, %p81
      %p84 = scmp.ne.s32.totalorder %s69, %s83
      %p85 = scmp.eq.s32.totalorder %s24, 0
      %p86 = por %p84, %p85
      %s88 = sadd.s32 %s87, 1
      %p91 = scmp.eq.s32.totalorder %s18, 1
      %p92 = scmp.ne.s32.totalorder %s87, %s89
      %p93 = scmp.eq.s32.totalorder %s18, 0
      %p94 = por %p92, %p93
      %p95 = scmp.ne.s32.totalorder %s87, %s89
      %p96 = scmp.eq.s32.totalorder %s23, 1
      %p97 = por %p95, %p96
      %p98 = scmp.ne.s32.totalorder %s89, %s90
      %p99 = scmp.eq.s32.totalorder %s23, 0
      %p100 = por %p98, %p99
      %p101 = scmp.ne.s32.totalorder %s89, %s90
      %p102 = scmp.eq.s32.totalorder %s24, 1
      %p103 = por %p101, %p102
      %p105 = scmp.ne.s32.totalorder %s90, %s104
      %p106 = scmp.eq.s32.totalorder %s24, 0
      %p107 = por %p105, %p106
      %s109 = sadd.s32 %s108, 1
      %p112 = scmp.eq.s32.totalorder %s18, 1
      %p113 = scmp.ne.s32.totalorder %s108, %s110
      %p114 = scmp.eq.s32.totalorder %s18, 0
      %p115 = por %p113, %p114
      %p116 = scmp.ne.s32.totalorder %s108, %s110
      %p117 = scmp.eq.s32.totalorder %s23, 1
      %p118 = por %p116, %p117
      %p119 = scmp.ne.s32.totalorder %s110, %s111
      %p120 = scmp.eq.s32.totalorder %s23, 0
      %p121 = por %p119, %p120
      %p122 = scmp.ne.s32.totalorder %s110, %s111
      %p123 = scmp.eq.s32.totalorder %s24, 1
      %p124 = por %p122, %p123
      %p126 = scmp.ne.s32.totalorder %s111, %s125
      %p127 = scmp.eq.s32.totalorder %s24, 0
      %p128 = por %p126, %p127
      %s130 = sadd.s32 %s129, 1
      %p133 = scmp.eq.s32.totalorder %s18, 1
      %p134 = scmp.ne.s32.totalorder %s129, %s131
      %p135 = scmp.eq.s32.totalorder %s18, 0
      %p136 = por %p134, %p135
      %p137 = scmp.ne.s32.totalorder %s129, %s131
      %p138 = scmp.eq.s32.totalorder %s23, 1
      %p139 = por %p137, %p138
      %p140 = scmp.ne.s32.totalorder %s131, %s132
      %p141 = scmp.eq.s32.totalorder %s23, 0
      %p142 = por %p140, %p141
      %p143 = scmp.ne.s32.totalorder %s131, %s132
      %p144 = scmp.eq.s32.totalorder %s24, 1
      %p145 = por %p143, %p144
      %p147 = scmp.ne.s32.totalorder %s132, %s146
      %p148 = scmp.eq.s32.totalorder %s24, 0
      %p149 = por %p147, %p148
      %s151 = sadd.s32 %s150, 1
      %p154 = scmp.eq.s32.totalorder %s18, 1
      %p155 = scmp.ne.s32.totalorder %s150, %s152
      %p156 = scmp.eq.s32.totalorder %s18, 0
      %p157 = por %p155, %p156
      %p158 = scmp.ne.s32.totalorder %s150, %s152
      %p159 = scmp.eq.s32.totalorder %s23, 1
      %p160 = por %p158, %p159
      %p161 = scmp.ne.s32.totalorder %s152, %s153
      %p162 = scmp.eq.s32.totalorder %s23, 0
      %p163 = por %p161, %p162
      %p164 = scmp.ne.s32.totalorder %s152, %s153
      %p165 = scmp.eq.s32.totalorder %s24, 1
      %p166 = por %p164, %p165
      %p168 = scmp.ne.s32.totalorder %s153, %s167
      %p169 = scmp.eq.s32.totalorder %s24, 0
      %p170 = por %p168, %p169
      %s172 = sadd.s32 %s171, 1
      %p175 = scmp.eq.s32.totalorder %s18, 1
      %p176 = scmp.ne.s32.totalorder %s171, %s173
      %p177 = scmp.eq.s32.totalorder %s18, 0
      %p178 = por %p176, %p177
      %p179 = scmp.ne.s32.totalorder %s171, %s173
      %p180 = scmp.eq.s32.totalorder %s23, 1
      %p181 = por %p179, %p180
      %p182 = scmp.ne.s32.totalorder %s173, %s174
      %p183 = scmp.eq.s32.totalorder %s23, 0
      %p184 = por %p182, %p183
      %p185 = scmp.ne.s32.totalorder %s173, %s174
      %p186 = scmp.eq.s32.totalorder %s24, 1
      %p187 = por %p185, %p186
      %p189 = scmp.ne.s32.totalorder %s174, %s188
      %p190 = scmp.eq.s32.totalorder %s24, 0
      %p191 = por %p189, %p190
      %s192 = ssub.s32 %s25, %s37
      %s193 = ssub.s32 %s26, %s33
      %s194 = sor.u32 %s192, %s193
      %p195 = scmp.eq.s32.totalorder %s194, 0
      %s197 = sadd.s32 %s196, 1
      %s198 = scalar_select %p195, %s196, %s197
      %p201 = pneg %p195
      %p202 = scmp.eq.s32.totalorder %s18, 1
      %p203 = por %p201, %p202
      %p204 = scmp.ne.s32.totalorder %s196, %s199
      %p205 = scmp.eq.s32.totalorder %s18, 0
      %p206 = por %p204, %p205
      %p207 = scmp.ne.s32.totalorder %s196, %s199
      %p208 = scmp.eq.s32.totalorder %s23, 1
      %p209 = por %p207, %p208
      %p210 = scmp.ne.s32.totalorder %s199, %s200
      %p211 = scmp.eq.s32.totalorder %s23, 0
      %p212 = por %p210, %p211
      %p213 = scmp.ne.s32.totalorder %s199, %s200
      %p214 = scmp.eq.s32.totalorder %s24, 1
      %p215 = por %p213, %p214
      %p217 = scmp.ne.s32.totalorder %s200, %s216
      %p218 = scmp.eq.s32.totalorder %s24, 0
      %p219 = por %p217, %p218
      %s220 = ssub.s32 %s25, %s37
      %s221 = ssub.s32 %s26, %s33
      %s222 = sor.u32 %s220, %s221
      %p223 = scmp.eq.s32.totalorder %s222, 0
      %s225 = sadd.s32 %s224, 1
      %s226 = scalar_select %p223, %s224, %s225
      %p229 = pneg %p223
      %p230 = scmp.eq.s32.totalorder %s18, 1
      %p231 = por %p229, %p230
      %p232 = scmp.ne.s32.totalorder %s224, %s227
      %p233 = scmp.eq.s32.totalorder %s18, 0
      %p234 = por %p232, %p233
      %p235 = scmp.ne.s32.totalorder %s224, %s227
      %p236 = scmp.eq.s32.totalorder %s23, 1
      %p237 = por %p235, %p236
      %p238 = scmp.ne.s32.totalorder %s227, %s228
      %p239 = scmp.eq.s32.totalorder %s23, 0
      %p240 = por %p238, %p239
      %p241 = scmp.ne.s32.totalorder %s227, %s228
      %p242 = scmp.eq.s32.totalorder %s24, 1
      %p243 = por %p241, %p242
      %p245 = scmp.ne.s32.totalorder %s228, %s244
      %p246 = scmp.eq.s32.totalorder %s24, 0
      %p247 = por %p245, %p246
      %p248 = scmp.le.s32.totalorder 1, %s18
      %p249 = scmp.lt.s32.totalorder %s18, 3
      %p250 = pnand %p248, %p249
      %p251 = pneg %p250
      // Predicated region
      $region9: #{tpu_custom_call.1} parent=5 // pred_check
        _
      $region10: #{tpu_custom_call.1} parent=5 // pred_check_branch
        %253 = sbr.rel (%p250) target = $region12
      $region11: #{tpu_custom_call.1} parent=5 // pred_region
        %s254 = ssub.s32 %s18, 1
        // Predicated region
        $region13: #{tpu_custom_call.1} parent=11 // pred_check
          %p255 = pneg %p79
        $region14: #{tpu_custom_call.1} parent=11 // pred_check_branch
          %257 = sbr.rel (%p255) target = $region16
        $region15: #{tpu_custom_call.1} parent=11 // pred_region
          _
        $region16: #{tpu_custom_call.1} parent=11 // pred_fallthru
          _
        // Predicated region
        $region17: #{tpu_custom_call.1} parent=11 // pred_check
          %p258 = pneg %p100
        $region18: #{tpu_custom_call.1} parent=11 // pred_check_branch
          %260 = sbr.rel (%p258) target = $region20
        $region19: #{tpu_custom_call.1} parent=11 // pred_region
          _
        $region20: #{tpu_custom_call.1} parent=11 // pred_fallthru
          _
        // Predicated region
        $region21: #{tpu_custom_call.1} parent=11 // pred_check
          %p261 = pneg %p121
        $region22: #{tpu_custom_call.1} parent=11 // pred_check_branch
          %263 = sbr.rel (%p261) target = $region24
        $region23: #{tpu_custom_call.1} parent=11 // pred_region
          _
        $region24: #{tpu_custom_call.1} parent=11 // pred_fallthru
          _
        // Predicated region
        $region25: #{tpu_custom_call.1} parent=11 // pred_check
          %p264 = pneg %p142
        $region26: #{tpu_custom_call.1} parent=11 // pred_check_branch
          %266 = sbr.rel (%p264) target = $region28
        $region27: #{tpu_custom_call.1} parent=11 // pred_region
          _
        $region28: #{tpu_custom_call.1} parent=11 // pred_fallthru
          _
        // Predicated region
        $region29: #{tpu_custom_call.1} parent=11 // pred_check
          %p267 = pneg %p163
        $region30: #{tpu_custom_call.1} parent=11 // pred_check_branch
          %269 = sbr.rel (%p267) target = $region32
        $region31: #{tpu_custom_call.1} parent=11 // pred_region
          _
        $region32: #{tpu_custom_call.1} parent=11 // pred_fallthru
          _
        // Predicated region
        $region33: #{tpu_custom_call.1} parent=11 // pred_check
          %p270 = pneg %p184
        $region34: #{tpu_custom_call.1} parent=11 // pred_check_branch
          %272 = sbr.rel (%p270) target = $region36
        $region35: #{tpu_custom_call.1} parent=11 // pred_region
          _
        $region36: #{tpu_custom_call.1} parent=11 // pred_fallthru
          _
      $region12: #{tpu_custom_call.1} parent=5 // pred_fallthru
        _
      %p273 = scmp.lt.s32.totalorder %s18, 2
      // Predicated region
      $region37: #{tpu_custom_call.1} parent=5 // pred_check
        %p274 = pneg %p273
      $region38: #{tpu_custom_call.1} parent=5 // pred_check_branch
        %276 = sbr.rel (%p274) target = $region40
      $region39: #{tpu_custom_call.1} parent=5 // pred_region
        // Predicated region
        $region41: #{tpu_custom_call.1} parent=39 // pred_check
          %p277 = pneg %p52
        $region42: #{tpu_custom_call.1} parent=39 // pred_check_branch
          %279 = sbr.rel (%p277) target = $region44
        $region43: #{tpu_custom_call.1} parent=39 // pred_region
          %s280 = smul.u32 8, %s26
          %p281 = scmp.lt.s32.totalorder %s25, 1
          %s282 = scalar_select %p281, %s25, 1
          %p283 = scmp.lt.s32.totalorder %s280, 7
          %s284 = scalar_select %p283, %s280, 7
          %s285 = smul.addr %s282, 8
          %s286 = sadd.s32 %s284, %s285
          %s287 = smul.addr %s286, 4
          %s288 = scalar_lea.vmem %s0, %s287
          %s289 = smul.u32 8, %s26
        $region44: #{tpu_custom_call.1} parent=39 // pred_fallthru
          _
      $region40: #{tpu_custom_call.1} parent=5 // pred_fallthru
        _
      %p290 = scmp.le.s32.totalorder 1, %s18
      %p291 = scmp.lt.s32.totalorder %s18, 3
      %p292 = pnand %p290, %p291
      %p293 = pneg %p292
      // Predicated region
      $region45: #{tpu_custom_call.1} parent=5 // pred_check
        _
      $region46: #{tpu_custom_call.1} parent=5 // pred_check_branch
        %295 = sbr.rel (%p292) target = $region48
      $region47: #{tpu_custom_call.1} parent=5 // pred_region
        %s296 = ssub.s32 %s18, 1
        %s297 = smul.u32 8, %s28
        %p298 = scmp.lt.s32.totalorder %s27, 1
        %s299 = scalar_select %p298, %s27, 1
        %p300 = scmp.lt.s32.totalorder %s297, 7
        %s301 = scalar_select %p300, %s297, 7
        %s302 = smul.addr %s299, 8
        %s303 = sadd.s32 %s301, %s302
        %s304 = smul.addr %s303, 4
        %s305 = scalar_lea.vmem %s0, %s304
        %p306 = pneg %p58
        %p307 = pneg %p55
        %p308 = pneg %p79
        %p309 = pneg %p76
        %p310 = pneg %p100
        %p311 = pneg %p97
        %p312 = pneg %p121
        %p313 = pneg %p118
        %p314 = pneg %p142
        %p315 = pneg %p139
        %p316 = pneg %p163
        %p317 = pneg %p160
        %p318 = pneg %p184
        %p319 = pneg %p181
        %p320 = pneg %p212
        %p321 = pneg %p209
        %s322 = sand.u32 %s199, 1
        %s323 = scalar_lea.sflag [#allocation3], %s322
        %s324 = sand.u32 %s199, 1
        %s325 = smul.addr %s324, 16
        %s326 = scalar_lea.vmem [#allocation2], %s325
        %p327 = pneg %p240
        %p328 = pneg %p237
        %s329 = smul.u32 8, %s28
        %p330 = scmp.lt.s32.totalorder %s27, 1
        %s331 = scalar_select %p330, %s27, 1
        %p332 = scmp.lt.s32.totalorder %s329, 7
        %s333 = scalar_select %p332, %s329, 7
        %s334 = smul.addr %s331, 32
        %s335 = sadd.s32 %s333, %s334
        %s336 = smul.addr %s335, 4
        %s337 = scalar_lea.vmem %s8, %s336
        %s338 = smul.u32 8, %s28
        %p339 = scmp.lt.s32.totalorder %s27, 1
        %s340 = scalar_select %p339, %s27, 1
        %p341 = scmp.lt.s32.totalorder %s338, 7
        %s342 = scalar_select %p341, %s338, 7
        %s343 = smul.addr %s340, 8
        %s344 = sadd.s32 %s342, %s343
        %s345 = smul.addr %s344, 4
        %s346 = scalar_lea.vmem %s0, %s345
        %s347 = smul.u32 8, %s28
        %s348 = smul.u32 8, %s28
        %p349 = scmp.lt.s32.totalorder %s27, 1
        %s350 = scalar_select %p349, %s27, 1
        %p351 = scmp.lt.s32.totalorder %s348, 7
        %s352 = scalar_select %p351, %s348, 7
        %s353 = smul.addr %s350, 32
        %s354 = sadd.s32 %s352, %s353
        %s355 = smul.addr %s354, 4
        %s356 = scalar_lea.vmem %s8, %s355
        %s357 = smul.u32 8, %s28
        %v359 = vld [vmem:[%s346] sm:$0xf]
        %v360 = vld [vmem:[%s346 + $0x4] sm:$0xf]
        %v361 = vld [vmem:[%s346 + $0x8] sm:$0xf]
        %v362 = vld [vmem:[%s346 + $0xc] sm:$0xf]
        %v363 = vld [vmem:[%s346 + $0x10] sm:$0xf]
        %v364 = vld [vmem:[%s346 + $0x14] sm:$0xf]
        %v365 = vld [vmem:[%s346 + $0x18] sm:$0xf]
        %v366 = vld [vmem:[%s346 + $0x1c] sm:$0xf]
        %v367 = vld [vmem:[%s1] sm:$0xf]
        %v368 = vld [vmem:[%s1 + $0x4] sm:$0xf]
        %v369 = vld [vmem:[%s1 + $0x8] sm:$0xf]
        %v370 = vld [vmem:[%s1 + $0xc] sm:$0xf]
        %v371 = vld [vmem:[%s1 + $0x10] sm:$0xf]
        %v372 = vld [vmem:[%s1 + $0x14] sm:$0xf]
        %v373 = vld [vmem:[%s1 + $0x18] sm:$0xf]
        %v374 = vld [vmem:[%s1 + $0x1c] sm:$0xf]
        %v375 = vld [vmem:[%s1 + $0x20] sm:$0xf]
        %v376 = vld [vmem:[%s1 + $0x24] sm:$0xf]
        %v377 = vld [vmem:[%s1 + $0x28] sm:$0xf]
        %v378 = vld [vmem:[%s1 + $0x2c] sm:$0xf]
        %v379 = vld [vmem:[%s1 + $0x30] sm:$0xf]
        %v380 = vld [vmem:[%s1 + $0x34] sm:$0xf]
        %v381 = vld [vmem:[%s1 + $0x38] sm:$0xf]
        %v382 = vld [vmem:[%s1 + $0x3c] sm:$0xf]
        %v383 = vld [vmem:[%s2] sm:$0x1]
        %v385 = vlaneseq
        %v386 = vshrl.u32 %v385, 7
        %v387 = vsub.s32 0, %v386
        %v388 = vrot.slane %v383, %v387
        %v398 = vunpack.c.l.b16 %v359
        %v399 = vunpack.c.l.b16 %v360
        %v400 = vunpack.c.l.b16 %v361
        %v401 = vunpack.c.l.b16 %v362
        %v402 = vunpack.c.l.b16 %v363
        %v403 = vunpack.c.l.b16 %v364
        %v404 = vunpack.c.l.b16 %v365
        %v405 = vunpack.c.l.b16 %v366
        %v406 = vpack.c.b16 %v399, %v398
        %v407 = vpack.c.b16 %v401, %v400
        %v408 = vpack.c.b16 %v403, %v402
        %v409 = vpack.c.b16 %v405, %v404
        %v430 = vunpack.c.l.b16 %v367
        %v431 = vunpack.c.l.b16 %v368
        %v432 = vunpack.c.l.b16 %v369
        %v433 = vunpack.c.l.b16 %v370
        %v434 = vunpack.c.l.b16 %v371
        %v435 = vunpack.c.l.b16 %v372
        %v436 = vunpack.c.l.b16 %v373
        %v437 = vunpack.c.l.b16 %v374
        %v438 = vunpack.c.l.b16 %v375
        %v439 = vunpack.c.l.b16 %v376
        %v440 = vunpack.c.l.b16 %v377
        %v441 = vunpack.c.l.b16 %v378
        %v442 = vunpack.c.l.b16 %v379
        %v443 = vunpack.c.l.b16 %v380
        %v444 = vunpack.c.l.b16 %v381
        %v445 = vunpack.c.l.b16 %v382
        %v446 = vpack.c.b16 %v431, %v430
        %v447 = vpack.c.b16 %v433, %v432
        %v448 = vpack.c.b16 %v435, %v434
        %v449 = vpack.c.b16 %v437, %v436
        %v450 = vpack.c.b16 %v439, %v438
        %v451 = vpack.c.b16 %v441, %v440
        %v452 = vpack.c.b16 %v443, %v442
        %v453 = vpack.c.b16 %v445, %v444
        %462 = vmatprep.subr.bf16.mxu0 0
        %463 = vmatpush1.bf16.msra.mxu0 %v446
        %464 = vmatprep.subr.bf16.mxu0 0
        %465 = vmatpush1.bf16.msra.mxu0 %v447
        %466 = vmatprep.subr.bf16.mxu0 0
        %467 = vmatpush1.bf16.msra.mxu0 %v448
        %468 = vmatprep.subr.bf16.mxu0 0
        %469 = vmatpush1.bf16.msra.mxu0 %v449
        %470 = vmatprep.subr.bf16.mxu0 0
        %471 = vmatpush1.bf16.msra.mxu0 %v450
        %472 = vmatprep.subr.bf16.mxu0 0
        %473 = vmatpush1.bf16.msra.mxu0 %v451
        %474 = vmatprep.subr.bf16.mxu0 0
        %475 = vmatpush1.bf16.msra.mxu0 %v452
        %476 = vmatprep.subr.bf16.mxu0 0
        %477 = vmatpush1.bf16.msra.mxu0 %v453
        %478 = vmatprep.subr.bf16.mxu0 0
        %479 = vmatpush1.bf16.msra.mxu0 0
        %480 = vmatprep.subr.bf16.mxu0 0
        %481 = vmatpush1.bf16.msra.mxu0 0
        %482 = vmatprep.subr.bf16.mxu0 0
        %483 = vmatpush1.bf16.msra.mxu0 0
        %484 = vmatprep.subr.bf16.mxu0 0
        %485 = vmatpush1.bf16.msra.mxu0 0
        %486 = vmatprep.subr.bf16.mxu0 0
        %487 = vmatpush1.bf16.msra.mxu0 0
        %488 = vmatprep.subr.bf16.mxu0 0
        %489 = vmatpush1.bf16.msra.mxu0 0
        %490 = vmatprep.subr.bf16.mxu0 0
        %491 = vmatpush1.bf16.msra.mxu0 0
        %492 = vmatprep.subr.bf16.mxu0 0
        %493 = vmatpush1.bf16.msra.mxu0 0
        %494 = vmatprep.mubr.bf16.mxu0 0
        %495 = vmatmul.mubr.bf16.gmra.mrb[0].mxu0 %v406
        %v496 = vpop.f32.mrb[0].mxu0
        %v497 = vadd.f32 %v388, %v496
        %v498 = vpop.f32.mrb[0].mxu0
        %v499 = vpop.f32.mrb[0].mxu0
        %v500 = vadd.f32 %v388, %v499
        %v501 = vpop.f32.mrb[0].mxu0
        %502 = vmatprep.mubr.bf16.mxu0 0
        %503 = vmatmul.mubr.bf16.gmra.mrb[0].mxu0 %v407
        %v504 = vpop.f32.mrb[0].mxu0
        %v505 = vadd.f32 %v388, %v504
        %v506 = vpop.f32.mrb[0].mxu0
        %v507 = vpop.f32.mrb[0].mxu0
        %v508 = vadd.f32 %v388, %v507
        %v509 = vpop.f32.mrb[0].mxu0
        %510 = vmatprep.mubr.bf16.mxu0 0
        %511 = vmatmul.mubr.bf16.gmra.mrb[0].mxu0 %v408
        %v512 = vpop.f32.mrb[0].mxu0
        %v513 = vadd.f32 %v388, %v512
        %v514 = vpop.f32.mrb[0].mxu0
        %v515 = vpop.f32.mrb[0].mxu0
        %v516 = vadd.f32 %v388, %v515
        %v517 = vpop.f32.mrb[0].mxu0
        %518 = vmatprep.mubr.bf16.mxu0 0
        %519 = vmatmul.mubr.bf16.gmra.mrb[0].mxu0 %v409
        %v520 = vpop.f32.mrb[0].mxu0
        %v521 = vadd.f32 %v388, %v520
        %v522 = vpop.f32.mrb[0].mxu0
        %v523 = vpop.f32.mrb[0].mxu0
        %v524 = vadd.f32 %v388, %v523
        %v525 = vpop.f32.mrb[0].mxu0
        %526 = vdwg.mxu0
        %vm527 = vcmask 261120
        %v528 = vsel %vm527, %v497, 0.0
        %529 = vadd.xlane.f32.xlu0 %v528
        %v530 = vpop.xlane.xlu0 %529
        %v531 = vsel %vm527, %v500, 0.0
        %532 = vadd.xlane.f32.xlu0 %v531
        %v533 = vpop.xlane.xlu0 %532
        %v534 = vsel %vm527, %v505, 0.0
        %535 = vadd.xlane.f32.xlu0 %v534
        %v536 = vpop.xlane.xlu0 %535
        %v537 = vsel %vm527, %v508, 0.0
        %538 = vadd.xlane.f32.xlu0 %v537
        %v539 = vpop.xlane.xlu0 %538
        %v540 = vsel %vm527, %v513, 0.0
        %541 = vadd.xlane.f32.xlu0 %v540
        %v542 = vpop.xlane.xlu0 %541
        %v543 = vsel %vm527, %v516, 0.0
        %544 = vadd.xlane.f32.xlu0 %v543
        %v545 = vpop.xlane.xlu0 %544
        %v546 = vsel %vm527, %v521, 0.0
        %547 = vadd.xlane.f32.xlu0 %v546
        %v548 = vpop.xlane.xlu0 %547
        %v549 = vsel %vm527, %v524, 0.0
        %550 = vadd.xlane.f32.xlu0 %v549
        %v551 = vpop.xlane.xlu0 %550
        %v552 = vrcp.pop 32.0
        %v553 = vmul.f32 %v530, %v552
        %v554 = vmul.f32 %v533, %v552
        %v555 = vmul.f32 %v536, %v552
        %v556 = vmul.f32 %v539, %v552
        %v557 = vmul.f32 %v542, %v552
        %v558 = vmul.f32 %v545, %v552
        %v559 = vmul.f32 %v548, %v552
        %v560 = vmul.f32 %v551, %v552
        %v561 = vsub.f32 %v497, %v553
        %v562 = vsub.f32 %v500, %v554
        %v563 = vsub.f32 %v505, %v555
        %v564 = vsub.f32 %v508, %v556
        %v565 = vsub.f32 %v513, %v557
        %v566 = vsub.f32 %v516, %v558
        %v567 = vsub.f32 %v521, %v559
        %v568 = vsub.f32 %v524, %v560
        %v569 = vmul.f32 %v561, %v561
        %v570 = vmul.f32 %v562, %v562
        %v571 = vmul.f32 %v563, %v563
        %v572 = vmul.f32 %v564, %v564
        %v573 = vmul.f32 %v565, %v565
        %v574 = vmul.f32 %v566, %v566
        %v575 = vmul.f32 %v567, %v567
        %v576 = vmul.f32 %v568, %v568
        %v577 = vsel %vm527, %v569, 0.0
        %578 = vadd.xlane.f32.xlu0 %v577
        %v579 = vpop.xlane.xlu0 %578
        %v580 = vsel %vm527, %v570, 0.0
        %581 = vadd.xlane.f32.xlu0 %v580
        %v582 = vpop.xlane.xlu0 %581
        %v583 = vsel %vm527, %v571, 0.0
        %584 = vadd.xlane.f32.xlu0 %v583
        %v585 = vpop.xlane.xlu0 %584
        %v586 = vsel %vm527, %v572, 0.0
        %587 = vadd.xlane.f32.xlu0 %v586
        %v588 = vpop.xlane.xlu0 %587
        %v589 = vsel %vm527, %v573, 0.0
        %590 = vadd.xlane.f32.xlu0 %v589
        %v591 = vpop.xlane.xlu0 %590
        %v592 = vsel %vm527, %v574, 0.0
        %593 = vadd.xlane.f32.xlu0 %v592
        %v594 = vpop.xlane.xlu0 %593
        %v595 = vsel %vm527, %v575, 0.0
        %596 = vadd.xlane.f32.xlu0 %v595
        %v597 = vpop.xlane.xlu0 %596
        %v598 = vsel %vm527, %v576, 0.0
        %599 = vadd.xlane.f32.xlu0 %v598
        %v600 = vpop.xlane.xlu0 %599
        %v601 = vmul.f32 %v579, %v552
        %v602 = vmul.f32 %v582, %v552
        %v603 = vmul.f32 %v585, %v552
        %v604 = vmul.f32 %v588, %v552
        %v605 = vmul.f32 %v591, %v552
        %v606 = vmul.f32 %v594, %v552
        %v607 = vmul.f32 %v597, %v552
        %v608 = vmul.f32 %v600, %v552
        %v609 = vadd.f32 %v601, 1e-05
        %v610 = vadd.f32 %v602, 1e-05
        %v611 = vadd.f32 %v603, 1e-05
        %v612 = vadd.f32 %v604, 1e-05
        %v613 = vadd.f32 %v605, 1e-05
        %v614 = vadd.f32 %v606, 1e-05
        %v615 = vadd.f32 %v607, 1e-05
        %v616 = vadd.f32 %v608, 1e-05
        %v617 = vrsqrt.pop %v609
        %v618 = vrsqrt.pop %v610
        %v619 = vrsqrt.pop %v611
        %v620 = vrsqrt.pop %v612
        %v621 = vrsqrt.pop %v613
        %v622 = vrsqrt.pop %v614
        %v623 = vrsqrt.pop %v615
        %v624 = vrsqrt.pop %v616
        %v625 = vmul.f32 %v561, %v617
        %v626 = vmul.f32 %v562, %v618
        %v627 = vmul.f32 %v563, %v619
        %v628 = vmul.f32 %v564, %v620
        %v629 = vmul.f32 %v565, %v621
        %v630 = vmul.f32 %v566, %v622
        %v631 = vmul.f32 %v567, %v623
        %v632 = vmul.f32 %v568, %v624
        %v633 = vld [vmem:[%s3] sm:$0x1]
        %v635 = vlaneseq
        %v636 = vshrl.u32 %v635, 7
        %v637 = vsub.s32 0, %v636
        %v638 = vrot.slane %v633, %v637
        %v640 = vmul.f32 %v625, %v638
        %v641 = vmul.f32 %v626, %v638
        %v642 = vmul.f32 %v627, %v638
        %v643 = vmul.f32 %v628, %v638
        %v644 = vmul.f32 %v629, %v638
        %v645 = vmul.f32 %v630, %v638
        %v646 = vmul.f32 %v631, %v638
        %v647 = vmul.f32 %v632, %v638
        %v648 = vld [vmem:[%s4] sm:$0x1]
        %v650 = vlaneseq
        %v651 = vshrl.u32 %v650, 7
        %v652 = vsub.s32 0, %v651
        %v653 = vrot.slane %v648, %v652
        %v655 = vadd.f32 %v640, %v653
        %v656 = vadd.f32 %v641, %v653
        %v657 = vadd.f32 %v642, %v653
        %v658 = vadd.f32 %v643, %v653
        %v659 = vadd.f32 %v644, %v653
        %v660 = vadd.f32 %v645, %v653
        %v661 = vadd.f32 %v646, %v653
        %v662 = vadd.f32 %v647, %v653
        %v663 = vpack.c.bf16 %v656, %v655
        %v664 = vpack.c.bf16 %v658, %v657
        %v665 = vpack.c.bf16 %v660, %v659
        %v666 = vpack.c.bf16 %v662, %v661
        %v667 = vld [vmem:[%s5] sm:$0xf]
        %v668 = vld [vmem:[%s5 + $0x4] sm:$0xf]
        %v669 = vld [vmem:[%s5 + $0x8] sm:$0xf]
        %v670 = vld [vmem:[%s5 + $0xc] sm:$0xf]
        %v672 = vsel %vm527, %v667, 0
        %v675 = vsel %vm527, %v663, 0
        %v678 = vsel %vm527, %v664, 0
        %v681 = vsel %vm527, %v665, 0
        %v684 = vsel %vm527, %v666, 0
        %686 = vmatprep.subr.bf16.mxu0 0
        %687 = vmatpush1.bf16.xpose.msra.mxu0 %v675
        %688 = vmatprep.subr.bf16.mxu0 0
        %689 = vmatpush1.bf16.xpose.msra.mxu0 %v678
        %690 = vmatprep.subr.bf16.mxu0 0
        %691 = vmatpush1.bf16.xpose.msra.mxu0 %v681
        %692 = vmatprep.subr.bf16.mxu0 0
        %693 = vmatpush1.bf16.xpose.msra.mxu0 %v684
        %694 = vmatprep.subr.bf16.mxu0 0
        %695 = vmatpush1.bf16.xpose.msra.mxu0 0
        %696 = vmatprep.subr.bf16.mxu0 0
        %697 = vmatpush1.bf16.xpose.msra.mxu0 0
        %698 = vmatprep.subr.bf16.mxu0 0
        %699 = vmatpush1.bf16.xpose.msra.mxu0 0
        %700 = vmatprep.subr.bf16.mxu0 0
        %701 = vmatpush1.bf16.xpose.msra.mxu0 0
        %702 = vmatprep.subr.bf16.mxu0 0
        %703 = vmatpush1.bf16.xpose.msra.mxu0 0
        %704 = vmatprep.subr.bf16.mxu0 0
        %705 = vmatpush1.bf16.xpose.msra.mxu0 0
        %706 = vmatprep.subr.bf16.mxu0 0
        %707 = vmatpush1.bf16.xpose.msra.mxu0 0
        %708 = vmatprep.subr.bf16.mxu0 0
        %709 = vmatpush1.bf16.xpose.msra.mxu0 0
        %710 = vmatprep.subr.bf16.mxu0 0
        %711 = vmatpush1.bf16.xpose.msra.mxu0 0
        %712 = vmatprep.subr.bf16.mxu0 0
        %713 = vmatpush1.bf16.xpose.msra.mxu0 0
        %714 = vmatprep.subr.bf16.mxu0 0
        %715 = vmatpush1.bf16.xpose.msra.mxu0 0
        %716 = vmatprep.subr.bf16.mxu0 0
        %717 = vmatpush1.bf16.xpose.msra.mxu0 0
        %718 = vmatprep.mubr.bf16.mxu0 0
        %719 = vmatmul.mubr.bf16.gmra.mrb[0].mxu0 %v672
        %v720 = vpop.f32.mrb[0].mxu0
        %v721 = vadd.f32 0.0, %v720
        %v722 = vpop.f32.mrb[0].mxu0
        %v723 = vpop.f32.mrb[0].mxu0
        %v724 = vpop.f32.mrb[0].mxu0
        %725 = vdwg.mxu0
        %v727 = vsel %vm527, %v668, 0
        %729 = vmatprep.subr.bf16.mxu0 0
        %730 = vmatpush1.bf16.xpose.msra.mxu0 %v675
        %731 = vmatprep.subr.bf16.mxu0 0
        %732 = vmatpush1.bf16.xpose.msra.mxu0 %v678
        %733 = vmatprep.subr.bf16.mxu0 0
        %734 = vmatpush1.bf16.xpose.msra.mxu0 %v681
        %735 = vmatprep.subr.bf16.mxu0 0
        %736 = vmatpush1.bf16.xpose.msra.mxu0 %v684
        %737 = vmatprep.subr.bf16.mxu0 0
        %738 = vmatpush1.bf16.xpose.msra.mxu0 0
        %739 = vmatprep.subr.bf16.mxu0 0
        %740 = vmatpush1.bf16.xpose.msra.mxu0 0
        %741 = vmatprep.subr.bf16.mxu0 0
        %742 = vmatpush1.bf16.xpose.msra.mxu0 0
        %743 = vmatprep.subr.bf16.mxu0 0
        %744 = vmatpush1.bf16.xpose.msra.mxu0 0
        %745 = vmatprep.subr.bf16.mxu0 0
        %746 = vmatpush1.bf16.xpose.msra.mxu0 0
        %747 = vmatprep.subr.bf16.mxu0 0
        %748 = vmatpush1.bf16.xpose.msra.mxu0 0
        %749 = vmatprep.subr.bf16.mxu0 0
        %750 = vmatpush1.bf16.xpose.msra.mxu0 0
        %751 = vmatprep.subr.bf16.mxu0 0
        %752 = vmatpush1.bf16.xpose.msra.mxu0 0
        %753 = vmatprep.subr.bf16.mxu0 0
        %754 = vmatpush1.bf16.xpose.msra.mxu0 0
        %755 = vmatprep.subr.bf16.mxu0 0
        %756 = vmatpush1.bf16.xpose.msra.mxu0 0
        %757 = vmatprep.subr.bf16.mxu0 0
        %758 = vmatpush1.bf16.xpose.msra.mxu0 0
        %759 = vmatprep.subr.bf16.mxu0 0
        %760 = vmatpush1.bf16.xpose.msra.mxu0 0
        %761 = vmatprep.mubr.bf16.mxu0 0
        %762 = vmatmul.mubr.bf16.gmra.mrb[0].mxu0 %v727
        %v763 = vpop.f32.mrb[0].mxu0
        %v764 = vadd.f32 0.0, %v763
        %v765 = vpop.f32.mrb[0].mxu0
        %v766 = vpop.f32.mrb[0].mxu0
        %v767 = vpop.f32.mrb[0].mxu0
        %768 = vdwg.mxu0
        %v770 = vsel %vm527, %v669, 0
        %772 = vmatprep.subr.bf16.mxu0 0
        %773 = vmatpush1.bf16.xpose.msra.mxu0 %v675
        %774 = vmatprep.subr.bf16.mxu0 0
        %775 = vmatpush1.bf16.xpose.msra.mxu0 %v678
        %776 = vmatprep.subr.bf16.mxu0 0
        %777 = vmatpush1.bf16.xpose.msra.mxu0 %v681
        %778 = vmatprep.subr.bf16.mxu0 0
        %779 = vmatpush1.bf16.xpose.msra.mxu0 %v684
        %780 = vmatprep.subr.bf16.mxu0 0
        %781 = vmatpush1.bf16.xpose.msra.mxu0 0
        %782 = vmatprep.subr.bf16.mxu0 0
        %783 = vmatpush1.bf16.xpose.msra.mxu0 0
        %784 = vmatprep.subr.bf16.mxu0 0
        %785 = vmatpush1.bf16.xpose.msra.mxu0 0
        %786 = vmatprep.subr.bf16.mxu0 0
        %787 = vmatpush1.bf16.xpose.msra.mxu0 0
        %788 = vmatprep.subr.bf16.mxu0 0
        %789 = vmatpush1.bf16.xpose.msra.mxu0 0
        %790 = vmatprep.subr.bf16.mxu0 0
        %791 = vmatpush1.bf16.xpose.msra.mxu0 0
        %792 = vmatprep.subr.bf16.mxu0 0
        %793 = vmatpush1.bf16.xpose.msra.mxu0 0
        %794 = vmatprep.subr.bf16.mxu0 0
        %795 = vmatpush1.bf16.xpose.msra.mxu0 0
        %796 = vmatprep.subr.bf16.mxu0 0
        %797 = vmatpush1.bf16.xpose.msra.mxu0 0
        %798 = vmatprep.subr.bf16.mxu0 0
        %799 = vmatpush1.bf16.xpose.msra.mxu0 0
        %800 = vmatprep.subr.bf16.mxu0 0
        %801 = vmatpush1.bf16.xpose.msra.mxu0 0
        %802 = vmatprep.subr.bf16.mxu0 0
        %803 = vmatpush1.bf16.xpose.msra.mxu0 0
        %804 = vmatprep.mubr.bf16.mxu0 0
        %805 = vmatmul.mubr.bf16.gmra.mrb[0].mxu0 %v770
        %v806 = vpop.f32.mrb[0].mxu0
        %v807 = vadd.f32 0.0, %v806
        %v808 = vpop.f32.mrb[0].mxu0
        %v809 = vpop.f32.mrb[0].mxu0
        %v810 = vpop.f32.mrb[0].mxu0
        %811 = vdwg.mxu0
        %v813 = vsel %vm527, %v670, 0
        %815 = vmatprep.subr.bf16.mxu0 0
        %816 = vmatpush1.bf16.xpose.msra.mxu0 %v675
        %817 = vmatprep.subr.bf16.mxu0 0
        %818 = vmatpush1.bf16.xpose.msra.mxu0 %v678
        %819 = vmatprep.subr.bf16.mxu0 0
        %820 = vmatpush1.bf16.xpose.msra.mxu0 %v681
        %821 = vmatprep.subr.bf16.mxu0 0
        %822 = vmatpush1.bf16.xpose.msra.mxu0 %v684
        %823 = vmatprep.subr.bf16.mxu0 0
        %824 = vmatpush1.bf16.xpose.msra.mxu0 0
        %825 = vmatprep.subr.bf16.mxu0 0
        %826 = vmatpush1.bf16.xpose.msra.mxu0 0
        %827 = vmatprep.subr.bf16.mxu0 0
        %828 = vmatpush1.bf16.xpose.msra.mxu0 0
        %829 = vmatprep.subr.bf16.mxu0 0
        %830 = vmatpush1.bf16.xpose.msra.mxu0 0
        %831 = vmatprep.subr.bf16.mxu0 0
        %832 = vmatpush1.bf16.xpose.msra.mxu0 0
        %833 = vmatprep.subr.bf16.mxu0 0
        %834 = vmatpush1.bf16.xpose.msra.mxu0 0
        %835 = vmatprep.subr.bf16.mxu0 0
        %836 = vmatpush1.bf16.xpose.msra.mxu0 0
        %837 = vmatprep.subr.bf16.mxu0 0
        %838 = vmatpush1.bf16.xpose.msra.mxu0 0
        %839 = vmatprep.subr.bf16.mxu0 0
        %840 = vmatpush1.bf16.xpose.msra.mxu0 0
        %841 = vmatprep.subr.bf16.mxu0 0
        %842 = vmatpush1.bf16.xpose.msra.mxu0 0
        %843 = vmatprep.subr.bf16.mxu0 0
        %844 = vmatpush1.bf16.xpose.msra.mxu0 0
        %845 = vmatprep.subr.bf16.mxu0 0
        %846 = vmatpush1.bf16.xpose.msra.mxu0 0
        %847 = vmatprep.mubr.bf16.mxu0 0
        %848 = vmatmul.mubr.bf16.gmra.mrb[0].mxu0 %v813
        %v849 = vpop.f32.mrb[0].mxu0
        %v850 = vadd.f32 0.0, %v849
        %v851 = vpop.f32.mrb[0].mxu0
        %v852 = vpop.f32.mrb[0].mxu0
        %v853 = vpop.f32.mrb[0].mxu0
        %854 = vdwg.mxu0
        %v855 = vld [vmem:[%s6] sm:$0xf]
        %v856 = vld [vmem:[%s6 + $0x4] sm:$0xf]
        %v857 = vld [vmem:[%s6 + $0x8] sm:$0xf]
        %v858 = vld [vmem:[%s6 + $0xc] sm:$0xf]
        %v859 = vld [vmem:[%s6 + $0x10] sm:$0xf]
        %v860 = vld [vmem:[%s6 + $0x14] sm:$0xf]
        %v861 = vld [vmem:[%s6 + $0x18] sm:$0xf]
        %v862 = vld [vmem:[%s6 + $0x1c] sm:$0xf]
        %v863 = vld [vmem:[%s6 + $0x20] sm:$0xf]
        %v864 = vld [vmem:[%s6 + $0x24] sm:$0xf]
        %v865 = vld [vmem:[%s6 + $0x28] sm:$0xf]
        %v866 = vld [vmem:[%s6 + $0x2c] sm:$0xf]
        %v867 = vld [vmem:[%s6 + $0x30] sm:$0xf]
        %v868 = vld [vmem:[%s6 + $0x34] sm:$0xf]
        %v869 = vld [vmem:[%s6 + $0x38] sm:$0xf]
        %v870 = vld [vmem:[%s6 + $0x3c] sm:$0xf]
        %v875 = vunpack.c.l.b16 %v855
        %v876 = vunpack.c.l.b16 %v856
        %v877 = vunpack.c.l.b16 %v857
        %v878 = vunpack.c.l.b16 %v858
        %v879 = vpack.c.b16 %v876, %v875
        %v880 = vpack.c.b16 %v878, %v877
        %883 = vmatprep.subr.bf16.mxu0 0
        %884 = vmatpush1.bf16.msra.mxu0 %v879
        %885 = vmatprep.subr.bf16.mxu0 0
        %886 = vmatpush1.bf16.msra.mxu0 %v880
        %887 = vmatprep.subr.bf16.mxu0 0
        %888 = vmatpush1.bf16.msra.mxu0 0
        %889 = vmatprep.subr.bf16.mxu0 0
        %890 = vmatpush1.bf16.msra.mxu0 0
        %891 = vmatprep.subr.bf16.mxu0 0
        %892 = vmatpush1.bf16.msra.mxu0 0
        %893 = vmatprep.subr.bf16.mxu0 0
        %894 = vmatpush1.bf16.msra.mxu0 0
        %895 = vmatprep.subr.bf16.mxu0 0
        %896 = vmatpush1.bf16.msra.mxu0 0
        %897 = vmatprep.subr.bf16.mxu0 0
        %898 = vmatpush1.bf16.msra.mxu0 0
        %899 = vmatprep.subr.bf16.mxu0 0
        %900 = vmatpush1.bf16.msra.mxu0 0
        %901 = vmatprep.subr.bf16.mxu0 0
        %902 = vmatpush1.bf16.msra.mxu0 0
        %903 = vmatprep.subr.bf16.mxu0 0
        %904 = vmatpush1.bf16.msra.mxu0 0
        %905 = vmatprep.subr.bf16.mxu0 0
        %906 = vmatpush1.bf16.msra.mxu0 0
        %907 = vmatprep.subr.bf16.mxu0 0
        %908 = vmatpush1.bf16.msra.mxu0 0
        %909 = vmatprep.subr.bf16.mxu0 0
        %910 = vmatpush1.bf16.msra.mxu0 0
        %911 = vmatprep.subr.bf16.mxu0 0
        %912 = vmatpush1.bf16.msra.mxu0 0
        %913 = vmatprep.subr.bf16.mxu0 0
        %914 = vmatpush1.bf16.msra.mxu0 0
        %915 = vmatprep.mubr.bf16.mxu0 0
        %916 = vmatmul.mubr.bf16.gmra.mrb[0].mxu0 %v675
        %v917 = vpop.f32.mrb[0].mxu0
        %v918 = vadd.f32 0.0, %v917
        %v919 = vpop.f32.mrb[0].mxu0
        %v920 = vpop.f32.mrb[0].mxu0
        %v921 = vadd.f32 0.0, %v920
        %v922 = vpop.f32.mrb[0].mxu0
        %923 = vmatprep.mubr.bf16.mxu0 0
        %924 = vmatmul.mubr.bf16.gmra.mrb[0].mxu0 %v678
        %v925 = vpop.f32.mrb[0].mxu0
        %v926 = vadd.f32 0.0, %v925
        %v927 = vpop.f32.mrb[0].mxu0
        %v928 = vpop.f32.mrb[0].mxu0
        %v929 = vadd.f32 0.0, %v928
        %v930 = vpop.f32.mrb[0].mxu0
        %931 = vmatprep.mubr.bf16.mxu0 0
        %932 = vmatmul.mubr.bf16.gmra.mrb[0].mxu0 %v681
        %v933 = vpop.f32.mrb[0].mxu0
        %v934 = vadd.f32 0.0, %v933
        %v935 = vpop.f32.mrb[0].mxu0
        %v936 = vpop.f32.mrb[0].mxu0
        %v937 = vadd.f32 0.0, %v936
        %v938 = vpop.f32.mrb[0].mxu0
        %939 = vmatprep.mubr.bf16.mxu0 0
        %940 = vmatmul.mubr.bf16.gmra.mrb[0].mxu0 %v684
        %v941 = vpop.f32.mrb[0].mxu0
        %v942 = vadd.f32 0.0, %v941
        %v943 = vpop.f32.mrb[0].mxu0
        %v944 = vpop.f32.mrb[0].mxu0
        %v945 = vadd.f32 0.0, %v944
        %v946 = vpop.f32.mrb[0].mxu0
        %947 = vdwg.mxu0
        %v952 = vunpack.c.l.b16 %v859
        %v953 = vunpack.c.l.b16 %v860
        %v954 = vunpack.c.l.b16 %v861
        %v955 = vunpack.c.l.b16 %v862
        %v956 = vpack.c.b16 %v953, %v952
        %v957 = vpack.c.b16 %v955, %v954
        %960 = vmatprep.subr.bf16.mxu0 0
        %961 = vmatpush1.bf16.msra.mxu0 %v956
        %962 = vmatprep.subr.bf16.mxu0 0
        %963 = vmatpush1.bf16.msra.mxu0 %v957
        %964 = vmatprep.subr.bf16.mxu0 0
        %965 = vmatpush1.bf16.msra.mxu0 0
        %966 = vmatprep.subr.bf16.mxu0 0
        %967 = vmatpush1.bf16.msra.mxu0 0
        %968 = vmatprep.subr.bf16.mxu0 0
        %969 = vmatpush1.bf16.msra.mxu0 0
        %970 = vmatprep.subr.bf16.mxu0 0
        %971 = vmatpush1.bf16.msra.mxu0 0
        %972 = vmatprep.subr.bf16.mxu0 0
        %973 = vmatpush1.bf16.msra.mxu0 0
        %974 = vmatprep.subr.bf16.mxu0 0
        %975 = vmatpush1.bf16.msra.mxu0 0
        %976 = vmatprep.subr.bf16.mxu0 0
        %977 = vmatpush1.bf16.msra.mxu0 0
        %978 = vmatprep.subr.bf16.mxu0 0
        %979 = vmatpush1.bf16.msra.mxu0 0
        %980 = vmatprep.subr.bf16.mxu0 0
        %981 = vmatpush1.bf16.msra.mxu0 0
        %982 = vmatprep.subr.bf16.mxu0 0
        %983 = vmatpush1.bf16.msra.mxu0 0
        %984 = vmatprep.subr.bf16.mxu0 0
        %985 = vmatpush1.bf16.msra.mxu0 0
        %986 = vmatprep.subr.bf16.mxu0 0
        %987 = vmatpush1.bf16.msra.mxu0 0
        %988 = vmatprep.subr.bf16.mxu0 0
        %989 = vmatpush1.bf16.msra.mxu0 0
        %990 = vmatprep.subr.bf16.mxu0 0
        %991 = vmatpush1.bf16.msra.mxu0 0
        %992 = vmatprep.mubr.bf16.mxu0 0
        %993 = vmatmul.mubr.bf16.gmra.mrb[0].mxu0 %v675
        %v994 = vpop.f32.mrb[0].mxu0
        %v995 = vadd.f32 0.0, %v994
        %v996 = vpop.f32.mrb[0].mxu0
        %v997 = vpop.f32.mrb[0].mxu0
        %v998 = vadd.f32 0.0, %v997
        %v999 = vpop.f32.mrb[0].mxu0
        %1000 = vmatprep.mubr.bf16.mxu0 0
        %1001 = vmatmul.mubr.bf16.gmra.mrb[0].mxu0 %v678
        %v1002 = vpop.f32.mrb[0].mxu0
        %v1003 = vadd.f32 0.0, %v1002
        %v1004 = vpop.f32.mrb[0].mxu0
        %v1005 = vpop.f32.mrb[0].mxu0
        %v1006 = vadd.f32 0.0, %v1005
        %v1007 = vpop.f32.mrb[0].mxu0
        %1008 = vmatprep.mubr.bf16.mxu0 0
        %1009 = vmatmul.mubr.bf16.gmra.mrb[0].mxu0 %v681
        %v1010 = vpop.f32.mrb[0].mxu0
        %v1011 = vadd.f32 0.0, %v1010
        %v1012 = vpop.f32.mrb[0].mxu0
        %v1013 = vpop.f32.mrb[0].mxu0
        %v1014 = vadd.f32 0.0, %v1013
        %v1015 = vpop.f32.mrb[0].mxu0
        %1016 = vmatprep.mubr.bf16.mxu0 0
        %1017 = vmatmul.mubr.bf16.gmra.mrb[0].mxu0 %v684
        %v1018 = vpop.f32.mrb[0].mxu0
        %v1019 = vadd.f32 0.0, %v1018
        %v1020 = vpop.f32.mrb[0].mxu0
        %v1021 = vpop.f32.mrb[0].mxu0
        %v1022 = vadd.f32 0.0, %v1021
        %v1023 = vpop.f32.mrb[0].mxu0
        %1024 = vdwg.mxu0
        %v1029 = vunpack.c.l.b16 %v863
        %v1030 = vunpack.c.l.b16 %v864
        %v1031 = vunpack.c.l.b16 %v865
        %v1032 = vunpack.c.l.b16 %v866
        %v1033 = vpack.c.b16 %v1030, %v1029
        %v1034 = vpack.c.b16 %v1032, %v1031
        %1037 = vmatprep.subr.bf16.mxu0 0
        %1038 = vmatpush1.bf16.msra.mxu0 %v1033
        %1039 = vmatprep.subr.bf16.mxu0 0
        %1040 = vmatpush1.bf16.msra.mxu0 %v1034
        %1041 = vmatprep.subr.bf16.mxu0 0
        %1042 = vmatpush1.bf16.msra.mxu0 0
        %1043 = vmatprep.subr.bf16.mxu0 0
        %1044 = vmatpush1.bf16.msra.mxu0 0
        %1045 = vmatprep.subr.bf16.mxu0 0
        %1046 = vmatpush1.bf16.msra.mxu0 0
        %1047 = vmatprep.subr.bf16.mxu0 0
        %1048 = vmatpush1.bf16.msra.mxu0 0
        %1049 = vmatprep.subr.bf16.mxu0 0
        %1050 = vmatpush1.bf16.msra.mxu0 0
        %1051 = vmatprep.subr.bf16.mxu0 0
        %1052 = vmatpush1.bf16.msra.mxu0 0
        %1053 = vmatprep.subr.bf16.mxu0 0
        %1054 = vmatpush1.bf16.msra.mxu0 0
        %1055 = vmatprep.subr.bf16.mxu0 0
        %1056 = vmatpush1.bf16.msra.mxu0 0
        %1057 = vmatprep.subr.bf16.mxu0 0
        %1058 = vmatpush1.bf16.msra.mxu0 0
        %1059 = vmatprep.subr.bf16.mxu0 0
        %1060 = vmatpush1.bf16.msra.mxu0 0
        %1061 = vmatprep.subr.bf16.mxu0 0
        %1062 = vmatpush1.bf16.msra.mxu0 0
        %1063 = vmatprep.subr.bf16.mxu0 0
        %1064 = vmatpush1.bf16.msra.mxu0 0
        %1065 = vmatprep.subr.bf16.mxu0 0
        %1066 = vmatpush1.bf16.msra.mxu0 0
        %1067 = vmatprep.subr.bf16.mxu0 0
        %1068 = vmatpush1.bf16.msra.mxu0 0
        %1069 = vmatprep.mubr.bf16.mxu0 0
        %1070 = vmatmul.mubr.bf16.gmra.mrb[0].mxu0 %v675
        %v1071 = vpop.f32.mrb[0].mxu0
        %v1072 = vadd.f32 0.0, %v1071
        %v1073 = vpop.f32.mrb[0].mxu0
        %v1074 = vpop.f32.mrb[0].mxu0
        %v1075 = vadd.f32 0.0, %v1074
        %v1076 = vpop.f32.mrb[0].mxu0
        %1077 = vmatprep.mubr.bf16.mxu0 0
        %1078 = vmatmul.mubr.bf16.gmra.mrb[0].mxu0 %v678
        %v1079 = vpop.f32.mrb[0].mxu0
        %v1080 = vadd.f32 0.0, %v1079
        %v1081 = vpop.f32.mrb[0].mxu0
        %v1082 = vpop.f32.mrb[0].mxu0
        %v1083 = vadd.f32 0.0, %v1082
        %v1084 = vpop.f32.mrb[0].mxu0
        %1085 = vmatprep.mubr.bf16.mxu0 0
        %1086 = vmatmul.mubr.bf16.gmra.mrb[0].mxu0 %v681
        %v1087 = vpop.f32.mrb[0].mxu0
        %v1088 = vadd.f32 0.0, %v1087
        %v1089 = vpop.f32.mrb[0].mxu0
        %v1090 = vpop.f32.mrb[0].mxu0
        %v1091 = vadd.f32 0.0, %v1090
        %v1092 = vpop.f32.mrb[0].mxu0
        %1093 = vmatprep.mubr.bf16.mxu0 0
        %1094 = vmatmul.mubr.bf16.gmra.mrb[0].mxu0 %v684
        %v1095 = vpop.f32.mrb[0].mxu0
        %v1096 = vadd.f32 0.0, %v1095
        %v1097 = vpop.f32.mrb[0].mxu0
        %v1098 = vpop.f32.mrb[0].mxu0
        %v1099 = vadd.f32 0.0, %v1098
        %v1100 = vpop.f32.mrb[0].mxu0
        %1101 = vdwg.mxu0
        %v1106 = vunpack.c.l.b16 %v867
        %v1107 = vunpack.c.l.b16 %v868
        %v1108 = vunpack.c.l.b16 %v869
        %v1109 = vunpack.c.l.b16 %v870
        %v1110 = vpack.c.b16 %v1107, %v1106
        %v1111 = vpack.c.b16 %v1109, %v1108
        %1114 = vmatprep.subr.bf16.mxu0 0
        %1115 = vmatpush1.bf16.msra.mxu0 %v1110
        %1116 = vmatprep.subr.bf16.mxu0 0
        %1117 = vmatpush1.bf16.msra.mxu0 %v1111
        %1118 = vmatprep.subr.bf16.mxu0 0
        %1119 = vmatpush1.bf16.msra.mxu0 0
        %1120 = vmatprep.subr.bf16.mxu0 0
        %1121 = vmatpush1.bf16.msra.mxu0 0
        %1122 = vmatprep.subr.bf16.mxu0 0
        %1123 = vmatpush1.bf16.msra.mxu0 0
        %1124 = vmatprep.subr.bf16.mxu0 0
        %1125 = vmatpush1.bf16.msra.mxu0 0
        %1126 = vmatprep.subr.bf16.mxu0 0
        %1127 = vmatpush1.bf16.msra.mxu0 0
        %1128 = vmatprep.subr.bf16.mxu0 0
        %1129 = vmatpush1.bf16.msra.mxu0 0
        %1130 = vmatprep.subr.bf16.mxu0 0
        %1131 = vmatpush1.bf16.msra.mxu0 0
        %1132 = vmatprep.subr.bf16.mxu0 0
        %1133 = vmatpush1.bf16.msra.mxu0 0
        %1134 = vmatprep.subr.bf16.mxu0 0
        %1135 = vmatpush1.bf16.msra.mxu0 0
        %1136 = vmatprep.subr.bf16.mxu0 0
        %1137 = vmatpush1.bf16.msra.mxu0 0
        %1138 = vmatprep.subr.bf16.mxu0 0
        %1139 = vmatpush1.bf16.msra.mxu0 0
        %1140 = vmatprep.subr.bf16.mxu0 0
        %1141 = vmatpush1.bf16.msra.mxu0 0
        %1142 = vmatprep.subr.bf16.mxu0 0
        %1143 = vmatpush1.bf16.msra.mxu0 0
        %1144 = vmatprep.subr.bf16.mxu0 0
        %1145 = vmatpush1.bf16.msra.mxu0 0
        %1146 = vmatprep.mubr.bf16.mxu0 0
        %1147 = vmatmul.mubr.bf16.gmra.mrb[0].mxu0 %v675
        %v1148 = vpop.f32.mrb[0].mxu0
        %v1149 = vadd.f32 0.0, %v1148
        %v1150 = vpop.f32.mrb[0].mxu0
        %v1151 = vpop.f32.mrb[0].mxu0
        %v1152 = vadd.f32 0.0, %v1151
        %v1153 = vpop.f32.mrb[0].mxu0
        %1154 = vmatprep.mubr.bf16.mxu0 0
        %1155 = vmatmul.mubr.bf16.gmra.mrb[0].mxu0 %v678
        %v1156 = vpop.f32.mrb[0].mxu0
        %v1157 = vadd.f32 0.0, %v1156
        %v1158 = vpop.f32.mrb[0].mxu0
        %v1159 = vpop.f32.mrb[0].mxu0
        %v1160 = vadd.f32 0.0, %v1159
        %v1161 = vpop.f32.mrb[0].mxu0
        %1162 = vmatprep.mubr.bf16.mxu0 0
        %1163 = vmatmul.mubr.bf16.gmra.mrb[0].mxu0 %v681
        %v1164 = vpop.f32.mrb[0].mxu0
        %v1165 = vadd.f32 0.0, %v1164
        %v1166 = vpop.f32.mrb[0].mxu0
        %v1167 = vpop.f32.mrb[0].mxu0
        %v1168 = vadd.f32 0.0, %v1167
        %v1169 = vpop.f32.mrb[0].mxu0
        %1170 = vmatprep.mubr.bf16.mxu0 0
        %1171 = vmatmul.mubr.bf16.gmra.mrb[0].mxu0 %v684
        %v1172 = vpop.f32.mrb[0].mxu0
        %v1173 = vadd.f32 0.0, %v1172
        %v1174 = vpop.f32.mrb[0].mxu0
        %v1175 = vpop.f32.mrb[0].mxu0
        %v1176 = vadd.f32 0.0, %v1175
        %v1177 = vpop.f32.mrb[0].mxu0
        %1178 = vdwg.mxu0
        %v1179 = vpack.c.bf16 %v721, %v721
        %v1180 = vpack.c.bf16 %v764, %v764
        %v1181 = vpack.c.bf16 %v807, %v807
        %v1182 = vpack.c.bf16 %v850, %v850
        %vm1183 = vcmask 519168
        %1184 = vst.msk [vmem:[%s326] sm:$0xf] %vm1183, %v1179
        %1185 = vst.msk [vmem:[%s326 + $0x4] sm:$0xf] %vm1183, %v1180
        %1186 = vst.msk [vmem:[%s326 + $0x8] sm:$0xf] %vm1183, %v1181
        %1187 = vst.msk [vmem:[%s326 + $0xc] sm:$0xf] %vm1183, %v1182
        %v1188 = vpack.c.bf16 %v921, %v918
        %v1189 = vpack.c.bf16 %v929, %v926
        %v1190 = vpack.c.bf16 %v937, %v934
        %v1191 = vpack.c.bf16 %v945, %v942
        %v1192 = vpack.c.bf16 %v998, %v995
        %v1193 = vpack.c.bf16 %v1006, %v1003
        %v1194 = vpack.c.bf16 %v1014, %v1011
        %v1195 = vpack.c.bf16 %v1022, %v1019
        %v1196 = vpack.c.bf16 %v1075, %v1072
        %v1197 = vpack.c.bf16 %v1083, %v1080
        %v1198 = vpack.c.bf16 %v1091, %v1088
        %v1199 = vpack.c.bf16 %v1099, %v1096
        %v1200 = vpack.c.bf16 %v1152, %v1149
        %v1201 = vpack.c.bf16 %v1160, %v1157
        %v1202 = vpack.c.bf16 %v1168, %v1165
        %v1203 = vpack.c.bf16 %v1176, %v1173
        %v1220 = vunpack.c.l.b16 %v1188
        %v1221 = vunpack.c.h.b16 %v1188
        %v1222 = vunpack.c.l.b16 %v1189
        %v1223 = vunpack.c.h.b16 %v1189
        %v1224 = vunpack.c.l.b16 %v1190
        %v1225 = vunpack.c.h.b16 %v1190
        %v1226 = vunpack.c.l.b16 %v1191
        %v1227 = vunpack.c.h.b16 %v1191
        %v1228 = vunpack.c.l.b16 %v1192
        %v1229 = vunpack.c.h.b16 %v1192
        %v1230 = vunpack.c.l.b16 %v1193
        %v1231 = vunpack.c.h.b16 %v1193
        %v1232 = vunpack.c.l.b16 %v1194
        %v1233 = vunpack.c.h.b16 %v1194
        %v1234 = vunpack.c.l.b16 %v1195
        %v1235 = vunpack.c.h.b16 %v1195
        %v1236 = vunpack.c.l.b16 %v1196
        %v1237 = vunpack.c.h.b16 %v1196
        %v1238 = vunpack.c.l.b16 %v1197
        %v1239 = vunpack.c.h.b16 %v1197
        %v1240 = vunpack.c.l.b16 %v1198
        %v1241 = vunpack.c.h.b16 %v1198
        %v1242 = vunpack.c.l.b16 %v1199
        %v1243 = vunpack.c.h.b16 %v1199
        %v1244 = vunpack.c.l.b16 %v1200
        %v1245 = vunpack.c.h.b16 %v1200
        %v1246 = vunpack.c.l.b16 %v1201
        %v1247 = vunpack.c.h.b16 %v1201
        %v1248 = vunpack.c.l.b16 %v1202
        %v1249 = vunpack.c.h.b16 %v1202
        %v1250 = vunpack.c.l.b16 %v1203
        %v1251 = vunpack.c.h.b16 %v1203
        %v1252 = vpack.c.b16 %v1220, %v1220
        %v1253 = vpack.c.b16 %v1221, %v1221
        %v1254 = vpack.c.b16 %v1222, %v1222
        %v1255 = vpack.c.b16 %v1223, %v1223
        %v1256 = vpack.c.b16 %v1224, %v1224
        %v1257 = vpack.c.b16 %v1225, %v1225
        %v1258 = vpack.c.b16 %v1226, %v1226
        %v1259 = vpack.c.b16 %v1227, %v1227
        %v1260 = vpack.c.b16 %v1228, %v1228
        %v1261 = vpack.c.b16 %v1229, %v1229
        %v1262 = vpack.c.b16 %v1230, %v1230
        %v1263 = vpack.c.b16 %v1231, %v1231
        %v1264 = vpack.c.b16 %v1232, %v1232
        %v1265 = vpack.c.b16 %v1233, %v1233
        %v1266 = vpack.c.b16 %v1234, %v1234
        %v1267 = vpack.c.b16 %v1235, %v1235
        %v1268 = vpack.c.b16 %v1236, %v1236
        %v1269 = vpack.c.b16 %v1237, %v1237
        %v1270 = vpack.c.b16 %v1238, %v1238
        %v1271 = vpack.c.b16 %v1239, %v1239
        %v1272 = vpack.c.b16 %v1240, %v1240
        %v1273 = vpack.c.b16 %v1241, %v1241
        %v1274 = vpack.c.b16 %v1242, %v1242
        %v1275 = vpack.c.b16 %v1243, %v1243
        %v1276 = vpack.c.b16 %v1244, %v1244
        %v1277 = vpack.c.b16 %v1245, %v1245
        %v1278 = vpack.c.b16 %v1246, %v1246
        %v1279 = vpack.c.b16 %v1247, %v1247
        %v1280 = vpack.c.b16 %v1248, %v1248
        %v1281 = vpack.c.b16 %v1249, %v1249
        %v1282 = vpack.c.b16 %v1250, %v1250
        %v1283 = vpack.c.b16 %v1251, %v1251
        %vm1316 = vcmask 60416
        %1317 = vst.msk [vmem:[%s356] sm:$0xf] %vm1316, %v1252
        %1318 = vst.msk [vmem:[%s356 + $0x4] sm:$0xf] %vm1316, %v1253
        %1319 = vst.msk [vmem:[%s356 + $0x8] sm:$0xf] %vm1316, %v1254
        %1320 = vst.msk [vmem:[%s356 + $0xc] sm:$0xf] %vm1316, %v1255
        %1321 = vst.msk [vmem:[%s356 + $0x10] sm:$0xf] %vm1316, %v1256
        %1322 = vst.msk [vmem:[%s356 + $0x14] sm:$0xf] %vm1316, %v1257
        %1323 = vst.msk [vmem:[%s356 + $0x18] sm:$0xf] %vm1316, %v1258
        %1324 = vst.msk [vmem:[%s356 + $0x1c] sm:$0xf] %vm1316, %v1259
        %1325 = vst.msk [vmem:[%s356 + $0x20] sm:$0xf] %vm1316, %v1260
        %1326 = vst.msk [vmem:[%s356 + $0x24] sm:$0xf] %vm1316, %v1261
        %1327 = vst.msk [vmem:[%s356 + $0x28] sm:$0xf] %vm1316, %v1262
        %1328 = vst.msk [vmem:[%s356 + $0x2c] sm:$0xf] %vm1316, %v1263
        %1329 = vst.msk [vmem:[%s356 + $0x30] sm:$0xf] %vm1316, %v1264
        %1330 = vst.msk [vmem:[%s356 + $0x34] sm:$0xf] %vm1316, %v1265
        %1331 = vst.msk [vmem:[%s356 + $0x38] sm:$0xf] %vm1316, %v1266
        %1332 = vst.msk [vmem:[%s356 + $0x3c] sm:$0xf] %vm1316, %v1267
        %1333 = vst.msk [vmem:[%s356 + $0x40] sm:$0xf] %vm1316, %v1268
        %1334 = vst.msk [vmem:[%s356 + $0x44] sm:$0xf] %vm1316, %v1269
        %1335 = vst.msk [vmem:[%s356 + $0x48] sm:$0xf] %vm1316, %v1270
        %1336 = vst.msk [vmem:[%s356 + $0x4c] sm:$0xf] %vm1316, %v1271
        %1337 = vst.msk [vmem:[%s356 + $0x50] sm:$0xf] %vm1316, %v1272
        %1338 = vst.msk [vmem:[%s356 + $0x54] sm:$0xf] %vm1316, %v1273
        %1339 = vst.msk [vmem:[%s356 + $0x58] sm:$0xf] %vm1316, %v1274
        %1340 = vst.msk [vmem:[%s356 + $0x5c] sm:$0xf] %vm1316, %v1275
        %1341 = vst.msk [vmem:[%s356 + $0x60] sm:$0xf] %vm1316, %v1276
        %1342 = vst.msk [vmem:[%s356 + $0x64] sm:$0xf] %vm1316, %v1277
        %1343 = vst.msk [vmem:[%s356 + $0x68] sm:$0xf] %vm1316, %v1278
        %1344 = vst.msk [vmem:[%s356 + $0x6c] sm:$0xf] %vm1316, %v1279
        %1345 = vst.msk [vmem:[%s356 + $0x70] sm:$0xf] %vm1316, %v1280
        %1346 = vst.msk [vmem:[%s356 + $0x74] sm:$0xf] %vm1316, %v1281
        %1347 = vst.msk [vmem:[%s356 + $0x78] sm:$0xf] %vm1316, %v1282
        %1348 = vst.msk [vmem:[%s356 + $0x7c] sm:$0xf] %vm1316, %v1283
        %s1349 = sand.u32 %s199, 1
        %s1350 = scalar_lea.sflag [#allocation3], %s1349
        %s1351 = sand.u32 %s199, 1
        %s1352 = smul.addr %s1351, 16
        %s1353 = scalar_lea.vmem [#allocation2], %s1352
        %s1354 = smul.u32 8, %s28
        %p1355 = scmp.lt.s32.totalorder %s27, 1
        %s1356 = scalar_select %p1355, %s27, 1
        %p1357 = scmp.lt.s32.totalorder %s1354, 7
        %s1358 = scalar_select %p1357, %s1354, 7
        %s1359 = smul.addr %s1356, 32
        %s1360 = sadd.s32 %s1358, %s1359
        %s1361 = smul.addr %s1360, 4
        %s1362 = scalar_lea.vmem %s8, %s1361
        // Predicated region
        $region49: #{tpu_custom_call.1} parent=47 // pred_check
          %p1363 = pneg %p209
        $region50: #{tpu_custom_call.1} parent=47 // pred_check_branch
          %1365 = sbr.rel (%p1363) target = $region52
        $region51: #{tpu_custom_call.1} parent=47 // pred_region
          %s1367 = ssub.s32 256, 256
          %1368 = vsyncadd %s1350, %s1367
          %s1369 = smul.addr %s27, 4
          %s1370 = sadd.s32 %s28, %s1369
          %s1371 = smul.addr %s1370, 64
          %s1372 = scalar_lea.hbm %s7, %s1371
          %s1373 = sshll.u32 %s1353, 4
          %s1374 = int_to_ptr.vmem [resolvable:$true] %s1373
          %1379 = dma.vmem_to_hbm [thread:$0]  %s1374, 256, %s1372, %s1350, 64, 64, 4
        $region52: #{tpu_custom_call.1} parent=47 // pred_fallthru
          _
        // Predicated region
        $region53: #{tpu_custom_call.1} parent=47 // pred_check
          %p1380 = pneg %p237
        $region54: #{tpu_custom_call.1} parent=47 // pred_check_branch
          %1382 = sbr.rel (%p1380) target = $region56
        $region55: #{tpu_custom_call.1} parent=47 // pred_region
          %s1383 = smul.u32 8, %s28
        $region56: #{tpu_custom_call.1} parent=47 // pred_fallthru
          _
      $region48: #{tpu_custom_call.1} parent=5 // pred_fallthru
        _
      %p1384 = scmp.le.s32.totalorder 2, %s18
      // Predicated region
      $region57: #{tpu_custom_call.1} parent=5 // pred_check
        %p1385 = pneg %p1384
      $region58: #{tpu_custom_call.1} parent=5 // pred_check_branch
        %1387 = sbr.rel (%p1385) target = $region60
      $region59: #{tpu_custom_call.1} parent=5 // pred_region
        %s1388 = ssub.s32 %s18, 2
        // Predicated region
        $region61: #{tpu_custom_call.1} parent=59 // pred_check
          %p1389 = pneg %p215
        $region62: #{tpu_custom_call.1} parent=59 // pred_check_branch
          %1391 = sbr.rel (%p1389) target = $region64
        $region63: #{tpu_custom_call.1} parent=59 // pred_region
          %s1392 = sand.u32 %s200, 1
          %s1393 = scalar_lea.sflag [#allocation3], %s1392
          %s1394 = sand.u32 %s200, 1
          %s1395 = smul.addr %s1394, 16
          %s1396 = scalar_lea.vmem [#allocation2], %s1395
          %1397 = dma.done %s1393, 256
        $region64: #{tpu_custom_call.1} parent=59 // pred_fallthru
          _
        // Predicated region
        $region65: #{tpu_custom_call.1} parent=59 // pred_check
          %p1398 = pneg %p243
        $region66: #{tpu_custom_call.1} parent=59 // pred_check_branch
          %1400 = sbr.rel (%p1398) target = $region68
        $region67: #{tpu_custom_call.1} parent=59 // pred_region
          %s1401 = smul.u32 8, %s30
          %p1402 = scmp.lt.s32.totalorder %s29, 1
          %s1403 = scalar_select %p1402, %s29, 1
          %p1404 = scmp.lt.s32.totalorder %s1401, 7
          %s1405 = scalar_select %p1404, %s1401, 7
          %s1406 = smul.addr %s1403, 32
          %s1407 = sadd.s32 %s1405, %s1406
          %s1408 = smul.addr %s1407, 4
          %s1409 = scalar_lea.vmem %s8, %s1408
        $region68: #{tpu_custom_call.1} parent=59 // pred_fallthru
          _
      $region60: #{tpu_custom_call.1} parent=5 // pred_fallthru
        _
    $region6: #{tpu_custom_call.1} parent=1 // loop_footer
      %s22 = sadd.s32 1, %s18
    $region7: #{tpu_custom_call.1} parent=1 // loop_footer_branch
      %17 = sbr.rel target = $region3
    $region8: #{tpu_custom_call.1} parent=1 // loop_exit
      _
    %1410 = vsyncpa [#allocation3], 1
    %s1411 = scalar_lea.sflag [#allocation3], 1
    %1412 = vsyncpa %s1411, 1

</llo_original>
